<compile_context>
chip_gen: v7x
topology: tpu7x:2x2x1
jax: 0.10.0
libtpu: 0.0.40
codegen_flags: <defaults>
</compile_context>

<pallas_src>
import functools

import numpy as np
import jax
import jax.numpy as jnp
from jax.experimental import pallas as pl
from jax.experimental.pallas import tpu as pltpu


@functools.lru_cache(maxsize=None)
def _build_shift_mask(k, H, W):
    """Static per-tap flattened-index shifts and zero-padding validity masks.

    Returns (shifts, mask) with shifts[t] the flat offset of tap t and
    mask[t, p] = 1.0 iff input pixel (p + shifts[t]) of tap t is in bounds.
    Tap order is dy-major, dx-minor (matches Wsp[0, c].reshape(-1)).
    """
    pad = k // 2
    oy = np.arange(H).reshape(H, 1)
    ox = np.arange(W).reshape(1, W)
    shifts, masks = [], []
    for dy in range(k):
        for dx in range(k):
            iy = oy + (dy - pad)
            ix = ox + (dx - pad)
            valid = ((iy >= 0) & (iy < H) & (ix >= 0) & (ix < W)).astype(np.float32)
            shifts.append((dy - pad) * W + (dx - pad))
            masks.append(valid.reshape(-1))
    return tuple(shifts), np.stack(masks)  # (k*k, H*W)


@functools.lru_cache(maxsize=None)
def _make_cbam_fn(B, C, H, Wd, Cr, ksize, Bt):
    """Build (once per shape signature) a jitted CBAM forward using one pallas_call."""
    HW = H * Wd
    ntaps = ksize * ksize
    grid = (B // Bt,)
    shifts, mask_np = _build_shift_mask(ksize, H, Wd)
    mask_const = jnp.asarray(mask_np)                    # (ntaps, HW) f32 constant

    # Pad the reduced channel dim to a sublane multiple. Exact: extra W1 columns are
    # zero (relu(0)=0) and the matching W2 rows are zero.
    Crp = ((Cr + 7) // 8) * 8

    inv_hw = 1.0 / HW
    inv_c = 1.0 / C

    def kernel(x_ref, w1_ref, w2_ref, wm_ref, bias_ref, o_ref):
        x = x_ref[...]                                   # (Bt, C, HW)

        # ---- channel attention: both SE branches, all Bt images, one MLP pass ----
        maxp = jnp.max(x, axis=2)                        # (Bt, C)
        avgp = jnp.sum(x, axis=2) * inv_hw               # (Bt, C)
        p = jnp.concatenate([maxp, avgp], axis=0)        # (2*Bt, C)
        h = jnp.maximum(
            jnp.dot(p, w1_ref[...], preferred_element_type=jnp.float32), 0.0)
        y = jnp.dot(h, w2_ref[...], preferred_element_type=jnp.float32)  # (2*Bt, C)
        ca = jax.nn.sigmoid(y[:Bt] + y[Bt:])             # (Bt, C)

        # ---- apply CA (kept in registers, no o_ref stash); pool over channels ----
        out1 = x * ca[:, :, None]                        # (Bt, C, HW)
        rmax = jnp.max(out1, axis=1)                     # (Bt, HW)
        ravg = jnp.sum(out1, axis=1) * inv_c             # (Bt, HW)
        cat = jnp.concatenate([rmax, ravg], axis=0)      # (2*Bt, HW)

        # ---- kxk SAME conv as ntaps shifted FMAs on ONE (2*Bt, HW) accumulator ----
        # wm_ref[t] already carries weight*mask pre-broadcast over the Bt sublanes of
        # each branch, so each tap is 1 static lane roll (XLU) + 1 mul + 1 add (VPU).
        s0 = shifts[0]
        acc = (cat if s0 == 0 else jnp.roll(cat, -s0, axis=1)) * wm_ref[0]
        for t in range(1, ntaps):
            s = shifts[t]
            shifted = cat if s == 0 else jnp.roll(cat, -s, axis=1)
            acc = acc + shifted * wm_ref[t]
        sa = jax.nn.sigmoid(acc[:Bt] + acc[Bt:] + bias_ref[0, 0])   # (Bt, HW)

        # ---- spatial attention + residual, single output write ----
        o_ref[...] = out1 * sa[:, None, :] + x

    # VMEM budget: only raise the scoped limit when the estimate actually needs it
    # (stays within the most conservative physical budget, v7x's 64 MiB per TC).
    block_bytes = Bt * C * HW * 4
    wm_bytes = ntaps * 2 * Bt * HW * 4
    est = 4 * block_bytes + 2 * wm_bytes + 4 * block_bytes + (1 << 20)
    vmem_limit = None
    if est > (16 << 20):
        vmem_limit = min(int(est * 1.5), 96 << 20)

    call = pl.pallas_call(
        kernel,
        out_shape=jax.ShapeDtypeStruct((B, C, HW), jnp.float32),
        grid=grid,
        in_specs=[
            pl.BlockSpec((Bt, C, HW), lambda b: (b, 0, 0)),
            pl.BlockSpec((C, Crp), lambda b: (0, 0)),
            pl.BlockSpec((Crp, C), lambda b: (0, 0)),
            pl.BlockSpec((ntaps, 2 * Bt, HW), lambda b: (0, 0, 0)),
            pl.BlockSpec((1, 1), lambda b: (0, 0),
                         memory_space=pltpu.MemorySpace.SMEM),
        ],
        out_specs=pl.BlockSpec((Bt, C, HW), lambda b: (b, 0, 0)),
        compiler_params=pltpu.CompilerParams(
            dimension_semantics=("parallel",),
            vmem_limit_bytes=vmem_limit),
    )

    @jax.jit
    def run(x, W1, W2, Wsp, bsp):
        x_flat = x.astype(jnp.float32).reshape(B, C, HW)
        w1t = jnp.pad(W1.astype(jnp.float32).T, ((0, 0), (0, Crp - Cr)))   # (C, Crp)
        w2t = jnp.pad(W2.astype(jnp.float32).T, ((0, Crp - Cr), (0, 0)))   # (Crp, C)
        wsp = Wsp.astype(jnp.float32)
        wm_max = wsp[0, 0].reshape(ntaps, 1) * mask_const                  # (ntaps, HW)
        wm_avg = wsp[0, 1].reshape(ntaps, 1) * mask_const                  # (ntaps, HW)
        wm_both = jnp.concatenate(
            [jnp.broadcast_to(wm_max[:, None, :], (ntaps, Bt, HW)),
             jnp.broadcast_to(wm_avg[:, None, :], (ntaps, Bt, HW))],
            axis=1)                                                        # (ntaps, 2*Bt, HW)
        bias = bsp.astype(jnp.float32).reshape(1, 1)
        out = call(x_flat, w1t, w2t, wm_both, bias)
        return out.reshape(B, C, H, Wd)

    return run


def cbam_pallas(x, W1, W2, Wsp, bsp, *, batch_tile=None):
    """CBAMBlock forward.  x: (B, C, H, W); W1: (Cr, C); W2: (C, Cr);
    Wsp: (1, 2, k, k); bsp: (1,).  batch_tile defaults to B (grid=(1,)); for large
    B pick batch_tile >= 8 sized so the double-buffered blocks fit VMEM."""
    B, C, H, Wd = x.shape
    Cr = int(W1.shape[0])
    ksize = int(Wsp.shape[-1])
    if batch_tile is None:
        batch_tile = B
    assert B % batch_tile == 0, "batch must be divisible by batch_tile"
    fn = _make_cbam_fn(B, C, H, Wd, Cr, ksize, int(batch_tile))
    return fn(x, W1, W2, Wsp, bsp)


def cbam_reference(x, W1, W2, Wsp, bsp):
    """Pure-JAX reference matching the PyTorch CBAMBlock forward."""
    maxp = jnp.max(x, axis=(2, 3), keepdims=True)
    avgp = jnp.mean(x, axis=(2, 3), keepdims=True)

    def se(p):  # 1x1 conv (bias=False) -> ReLU -> 1x1 conv (bias=False)
        h = jax.nn.relu(jnp.einsum('rc,bcij->brij', W1, p))
        return jnp.einsum('cr,brij->bcij', W2, h)

    ca = jax.nn.sigmoid(se(maxp) + se(avgp))
    out = x * ca
    maxc = jnp.max(out, axis=1, keepdims=True)
    avgc = jnp.mean(out, axis=1, keepdims=True)
    cat = jnp.concatenate([maxc, avgc], axis=1)            # (B, 2, H, W)
    sa = jax.nn.sigmoid(
        jax.lax.conv_general_dilated(
            cat, Wsp, (1, 1), 'SAME',
            dimension_numbers=('NCHW', 'OIHW', 'NCHW'))
        + bsp.reshape(1, 1, 1, 1))
    return out * sa + x


if __name__ == "__main__":
    # small, CBAM-consistent shapes: channel=32, reduction=8, kernel_size=7
    B, C, H, W = 2, 32, 16, 16
    reduction, ksize = 8, 7
    Cr = C // reduction

    key = jax.random.PRNGKey(0)
    kx, k1, k2, k3, k4 = jax.random.split(key, 5)
    x = jax.random.normal(kx, (B, C, H, W), jnp.float32)
    W1 = jax.random.normal(k1, (Cr, C), jnp.float32) * 0.2      # 1x1 conv, no bias
    W2 = jax.random.normal(k2, (C, Cr), jnp.float32) * 0.2      # 1x1 conv, no bias
    Wsp = jax.random.normal(k3, (1, 2, ksize, ksize), jnp.float32) * 0.1  # 7x7 conv
    bsp = jax.random.normal(k4, (1,), jnp.float32) * 0.1        # 7x7 conv bias

    out = jax.block_until_ready(cbam_pallas(x, W1, W2, Wsp, bsp))
    ref = jax.block_until_ready(cbam_reference(x, W1, W2, Wsp, bsp))
    if not np.allclose(np.asarray(out), np.asarray(ref), rtol=1e-3, atol=1e-3):
        raise AssertionError("Pallas CBAM output mismatch vs reference")

    print("KERNEL_OK")
</pallas_src>

<mosaic_0001>
module attributes {stable_mosaic.version = 11 : i64} {
  func.func @kernel(%arg0: i32, %arg1: memref<2x32x256xf32, #tpu.memory_space<vmem>>, %arg2: memref<32x8xf32, #tpu.memory_space<vmem>>, %arg3: memref<8x32xf32, #tpu.memory_space<vmem>>, %arg4: memref<49x4x256xf32, #tpu.memory_space<vmem>>, %arg5: memref<1x1xf32, #tpu.memory_space<smem>>, %arg6: memref<2x32x256xf32, #tpu.memory_space<vmem>>) attributes {dimension_semantics = [#tpu.dimension_semantics<parallel>], iteration_bounds = array<i64: 1>, scalar_prefetch = 0 : i64, scratch_operands = 0 : i64, tpu.core_type = #tpu.core_type<tc>, window_params = [{transform_indices = @transform_0, window_bounds = array<i64: 2, 32, 256>}, {pipeline_mode = #tpu.pipeline_mode<synchronous>, transform_indices = @transform_1, window_bounds = array<i64: 32, 8>}, {pipeline_mode = #tpu.pipeline_mode<synchronous>, transform_indices = @transform_2, window_bounds = array<i64: 8, 32>}, {pipeline_mode = #tpu.pipeline_mode<synchronous>, transform_indices = @transform_3, window_bounds = array<i64: 49, 4, 256>}, {transform_indices = @transform_4, window_bounds = array<i64: 1, 1>}, {transform_indices = @transform_5, window_bounds = array<i64: 2, 32, 256>}]} {
    %c0 = arith.constant 0 : index
    %c0_0 = arith.constant 0 : index
    %c0_1 = arith.constant 0 : index
    %0 = vector.load %arg1[%c0, %c0_0, %c0_1] : memref<2x32x256xf32, #tpu.memory_space<vmem>>, vector<2x32x256xf32>
    %cst = arith.constant dense<0xFF800000> : vector<2x32xf32>
    %1 = vector.multi_reduction <maximumf>, %0, %cst [2] : vector<2x32x256xf32> to vector<2x32xf32>
    %cst_2 = arith.constant dense<0.000000e+00> : vector<2x32xf32>
    %2 = vector.multi_reduction <add>, %0, %cst_2 [2] : vector<2x32x256xf32> to vector<2x32xf32>
    %cst_3 = arith.constant 3.906250e-03 : f32
    %3 = vector.broadcast %cst_3 : f32 to vector<2x32xf32>
    %4 = arith.mulf %2, %3 : vector<2x32xf32>
    %5 = tpu.concatenate %1, %4 in 0 : vector<2x32xf32>, vector<2x32xf32> -> vector<4x32xf32>
    %c0_4 = arith.constant 0 : index
    %c0_5 = arith.constant 0 : index
    %6 = vector.load %arg2[%c0_4, %c0_5] : memref<32x8xf32, #tpu.memory_space<vmem>>, vector<32x8xf32>
    %cst_6 = arith.constant dense<0.000000e+00> : vector<4x8xf32>
    %7 = tpu.matmul %5, %6, %cst_6 {dimension_numbers = #tpu.dot_dimension_numbers<[1], [0], [0], [1], [0, 0, 1, 1], [], []>} : vector<4x32xf32>, vector<32x8xf32>, vector<4x8xf32> -> vector<4x8xf32>
    %cst_7 = arith.constant 0.000000e+00 : f32
    %8 = vector.broadcast %cst_7 : f32 to vector<4x8xf32>
    %9 = arith.maximumf %7, %8 : vector<4x8xf32>
    %c0_8 = arith.constant 0 : index
    %c0_9 = arith.constant 0 : index
    %10 = vector.load %arg3[%c0_8, %c0_9] : memref<8x32xf32, #tpu.memory_space<vmem>>, vector<8x32xf32>
    %cst_10 = arith.constant dense<0.000000e+00> : vector<4x32xf32>
    %11 = tpu.matmul %9, %10, %cst_10 {dimension_numbers = #tpu.dot_dimension_numbers<[1], [0], [0], [1], [0, 0, 1, 1], [], []>} : vector<4x8xf32>, vector<8x32xf32>, vector<4x32xf32> -> vector<4x32xf32>
    %12 = vector.extract_strided_slice %11 {offsets = [0, 0], sizes = [2, 32], strides = [1, 1]} : vector<4x32xf32> to vector<2x32xf32>
    %13 = vector.extract_strided_slice %11 {offsets = [2, 0], sizes = [2, 32], strides = [1, 1]} : vector<4x32xf32> to vector<2x32xf32>
    %14 = arith.addf %12, %13 : vector<2x32xf32>
    %15 = arith.negf %14 : vector<2x32xf32>
    %16 = math.exp %15 : vector<2x32xf32>
    %cst_11 = arith.constant 1.000000e+00 : f32
    %17 = vector.broadcast %cst_11 : f32 to vector<2x32xf32>
    %18 = arith.addf %17, %16 : vector<2x32xf32>
    %19 = arith.divf %17, %18 : vector<2x32xf32>
    %20 = vector.shape_cast %19 : vector<2x32xf32> to vector<2x32x1xf32>
    %21 = vector.broadcast %20 : vector<2x32x1xf32> to vector<2x32x256xf32>
    %22 = arith.mulf %0, %21 : vector<2x32x256xf32>
    %cst_12 = arith.constant dense<0xFF800000> : vector<2x256xf32>
    %23 = vector.multi_reduction <maximumf>, %22, %cst_12 [1] : vector<2x32x256xf32> to vector<2x256xf32>
    %cst_13 = arith.constant dense<0.000000e+00> : vector<2x256xf32>
    %24 = vector.multi_reduction <add>, %22, %cst_13 [1] : vector<2x32x256xf32> to vector<2x256xf32>
    %cst_14 = arith.constant 3.125000e-02 : f32
    %25 = vector.broadcast %cst_14 : f32 to vector<2x256xf32>
    %26 = arith.mulf %24, %25 : vector<2x256xf32>
    %27 = tpu.concatenate %23, %26 in 0 : vector<2x256xf32>, vector<2x256xf32> -> vector<4x256xf32>
    %28 = vector.extract_strided_slice %27 {offsets = [0, 205], sizes = [4, 51], strides = [1, 1]} : vector<4x256xf32> to vector<4x51xf32>
    %29 = vector.extract_strided_slice %27 {offsets = [0, 0], sizes = [4, 205], strides = [1, 1]} : vector<4x256xf32> to vector<4x205xf32>
    %30 = tpu.concatenate %28, %29 in 1 : vector<4x51xf32>, vector<4x205xf32> -> vector<4x256xf32>
    %c0_15 = arith.constant 0 : index
    %c0_16 = arith.constant 0 : index
    %c0_17 = arith.constant 0 : index
    %31 = vector.load %arg4[%c0_15, %c0_16, %c0_17] : memref<49x4x256xf32, #tpu.memory_space<vmem>>, vector<1x4x256xf32>
    %32 = vector.shape_cast %31 : vector<1x4x256xf32> to vector<4x256xf32>
    %33 = arith.mulf %30, %32 : vector<4x256xf32>
    %34 = vector.extract_strided_slice %27 {offsets = [0, 206], sizes = [4, 50], strides = [1, 1]} : vector<4x256xf32> to vector<4x50xf32>
    %35 = vector.extract_strided_slice %27 {offsets = [0, 0], sizes = [4, 206], strides = [1, 1]} : vector<4x256xf32> to vector<4x206xf32>
    %36 = tpu.concatenate %34, %35 in 1 : vector<4x50xf32>, vector<4x206xf32> -> vector<4x256xf32>
    %c1 = arith.constant 1 : index
    %c0_18 = arith.constant 0 : index
    %c0_19 = arith.constant 0 : index
    %37 = vector.load %arg4[%c1, %c0_18, %c0_19] : memref<49x4x256xf32, #tpu.memory_space<vmem>>, vector<1x4x256xf32>
    %38 = vector.shape_cast %37 : vector<1x4x256xf32> to vector<4x256xf32>
    %39 = arith.mulf %36, %38 : vector<4x256xf32>
    %40 = arith.addf %33, %39 : vector<4x256xf32>
    %41 = vector.extract_strided_slice %27 {offsets = [0, 207], sizes = [4, 49], strides = [1, 1]} : vector<4x256xf32> to vector<4x49xf32>
    %42 = vector.extract_strided_slice %27 {offsets = [0, 0], sizes = [4, 207], strides = [1, 1]} : vector<4x256xf32> to vector<4x207xf32>
    %43 = tpu.concatenate %41, %42 in 1 : vector<4x49xf32>, vector<4x207xf32> -> vector<4x256xf32>
    %c2 = arith.constant 2 : index
    %c0_20 = arith.constant 0 : index
    %c0_21 = arith.constant 0 : index
    %44 = vector.load %arg4[%c2, %c0_20, %c0_21] : memref<49x4x256xf32, #tpu.memory_space<vmem>>, vector<1x4x256xf32>
    %45 = vector.shape_cast %44 : vector<1x4x256xf32> to vector<4x256xf32>
    %46 = arith.mulf %43, %45 : vector<4x256xf32>
    %47 = arith.addf %40, %46 : vector<4x256xf32>
    %48 = vector.extract_strided_slice %27 {offsets = [0, 208], sizes = [4, 48], strides = [1, 1]} : vector<4x256xf32> to vector<4x48xf32>
    %49 = vector.extract_strided_slice %27 {offsets = [0, 0], sizes = [4, 208], strides = [1, 1]} : vector<4x256xf32> to vector<4x208xf32>
    %50 = tpu.concatenate %48, %49 in 1 : vector<4x48xf32>, vector<4x208xf32> -> vector<4x256xf32>
    %c3 = arith.constant 3 : index
    %c0_22 = arith.constant 0 : index
    %c0_23 = arith.constant 0 : index
    %51 = vector.load %arg4[%c3, %c0_22, %c0_23] : memref<49x4x256xf32, #tpu.memory_space<vmem>>, vector<1x4x256xf32>
    %52 = vector.shape_cast %51 : vector<1x4x256xf32> to vector<4x256xf32>
    %53 = arith.mulf %50, %52 : vector<4x256xf32>
    %54 = arith.addf %47, %53 : vector<4x256xf32>
    %55 = vector.extract_strided_slice %27 {offsets = [0, 209], sizes = [4, 47], strides = [1, 1]} : vector<4x256xf32> to vector<4x47xf32>
    %56 = vector.extract_strided_slice %27 {offsets = [0, 0], sizes = [4, 209], strides = [1, 1]} : vector<4x256xf32> to vector<4x209xf32>
    %57 = tpu.concatenate %55, %56 in 1 : vector<4x47xf32>, vector<4x209xf32> -> vector<4x256xf32>
    %c4 = arith.constant 4 : index
    %c0_24 = arith.constant 0 : index
    %c0_25 = arith.constant 0 : index
    %58 = vector.load %arg4[%c4, %c0_24, %c0_25] : memref<49x4x256xf32, #tpu.memory_space<vmem>>, vector<1x4x256xf32>
    %59 = vector.shape_cast %58 : vector<1x4x256xf32> to vector<4x256xf32>
    %60 = arith.mulf %57, %59 : vector<4x256xf32>
    %61 = arith.addf %54, %60 : vector<4x256xf32>
    %62 = vector.extract_strided_slice %27 {offsets = [0, 210], sizes = [4, 46], strides = [1, 1]} : vector<4x256xf32> to vector<4x46xf32>
    %63 = vector.extract_strided_slice %27 {offsets = [0, 0], sizes = [4, 210], strides = [1, 1]} : vector<4x256xf32> to vector<4x210xf32>
    %64 = tpu.concatenate %62, %63 in 1 : vector<4x46xf32>, vector<4x210xf32> -> vector<4x256xf32>
    %c5 = arith.constant 5 : index
    %c0_26 = arith.constant 0 : index
    %c0_27 = arith.constant 0 : index
    %65 = vector.load %arg4[%c5, %c0_26, %c0_27] : memref<49x4x256xf32, #tpu.memory_space<vmem>>, vector<1x4x256xf32>
    %66 = vector.shape_cast %65 : vector<1x4x256xf32> to vector<4x256xf32>
    %67 = arith.mulf %64, %66 : vector<4x256xf32>
    %68 = arith.addf %61, %67 : vector<4x256xf32>
    %69 = vector.extract_strided_slice %27 {offsets = [0, 211], sizes = [4, 45], strides = [1, 1]} : vector<4x256xf32> to vector<4x45xf32>
    %70 = vector.extract_strided_slice %27 {offsets = [0, 0], sizes = [4, 211], strides = [1, 1]} : vector<4x256xf32> to vector<4x211xf32>
    %71 = tpu.concatenate %69, %70 in 1 : vector<4x45xf32>, vector<4x211xf32> -> vector<4x256xf32>
    %c6 = arith.constant 6 : index
    %c0_28 = arith.constant 0 : index
    %c0_29 = arith.constant 0 : index
    %72 = vector.load %arg4[%c6, %c0_28, %c0_29] : memref<49x4x256xf32, #tpu.memory_space<vmem>>, vector<1x4x256xf32>
    %73 = vector.shape_cast %72 : vector<1x4x256xf32> to vector<4x256xf32>
    %74 = arith.mulf %71, %73 : vector<4x256xf32>
    %75 = arith.addf %68, %74 : vector<4x256xf32>
    %76 = vector.extract_strided_slice %27 {offsets = [0, 221], sizes = [4, 35], strides = [1, 1]} : vector<4x256xf32> to vector<4x35xf32>
    %77 = vector.extract_strided_slice %27 {offsets = [0, 0], sizes = [4, 221], strides = [1, 1]} : vector<4x256xf32> to vector<4x221xf32>
    %78 = tpu.concatenate %76, %77 in 1 : vector<4x35xf32>, vector<4x221xf32> -> vector<4x256xf32>
    %c7 = arith.constant 7 : index
    %c0_30 = arith.constant 0 : index
    %c0_31 = arith.constant 0 : index
    %79 = vector.load %arg4[%c7, %c0_30, %c0_31] : memref<49x4x256xf32, #tpu.memory_space<vmem>>, vector<1x4x256xf32>
    %80 = vector.shape_cast %79 : vector<1x4x256xf32> to vector<4x256xf32>
    %81 = arith.mulf %78, %80 : vector<4x256xf32>
    %82 = arith.addf %75, %81 : vector<4x256xf32>
    %83 = vector.extract_strided_slice %27 {offsets = [0, 222], sizes = [4, 34], strides = [1, 1]} : vector<4x256xf32> to vector<4x34xf32>
    %84 = vector.extract_strided_slice %27 {offsets = [0, 0], sizes = [4, 222], strides = [1, 1]} : vector<4x256xf32> to vector<4x222xf32>
    %85 = tpu.concatenate %83, %84 in 1 : vector<4x34xf32>, vector<4x222xf32> -> vector<4x256xf32>
    %c8 = arith.constant 8 : index
    %c0_32 = arith.constant 0 : index
    %c0_33 = arith.constant 0 : index
    %86 = vector.load %arg4[%c8, %c0_32, %c0_33] : memref<49x4x256xf32, #tpu.memory_space<vmem>>, vector<1x4x256xf32>
    %87 = vector.shape_cast %86 : vector<1x4x256xf32> to vector<4x256xf32>
    %88 = arith.mulf %85, %87 : vector<4x256xf32>
    %89 = arith.addf %82, %88 : vector<4x256xf32>
    %90 = vector.extract_strided_slice %27 {offsets = [0, 223], sizes = [4, 33], strides = [1, 1]} : vector<4x256xf32> to vector<4x33xf32>
    %91 = vector.extract_strided_slice %27 {offsets = [0, 0], sizes = [4, 223], strides = [1, 1]} : vector<4x256xf32> to vector<4x223xf32>
    %92 = tpu.concatenate %90, %91 in 1 : vector<4x33xf32>, vector<4x223xf32> -> vector<4x256xf32>
    %c9 = arith.constant 9 : index
    %c0_34 = arith.constant 0 : index
    %c0_35 = arith.constant 0 : index
    %93 = vector.load %arg4[%c9, %c0_34, %c0_35] : memref<49x4x256xf32, #tpu.memory_space<vmem>>, vector<1x4x256xf32>
    %94 = vector.shape_cast %93 : vector<1x4x256xf32> to vector<4x256xf32>
    %95 = arith.mulf %92, %94 : vector<4x256xf32>
    %96 = arith.addf %89, %95 : vector<4x256xf32>
    %97 = vector.extract_strided_slice %27 {offsets = [0, 224], sizes = [4, 32], strides = [1, 1]} : vector<4x256xf32> to vector<4x32xf32>
    %98 = vector.extract_strided_slice %27 {offsets = [0, 0], sizes = [4, 224], strides = [1, 1]} : vector<4x256xf32> to vector<4x224xf32>
    %99 = tpu.concatenate %97, %98 in 1 : vector<4x32xf32>, vector<4x224xf32> -> vector<4x256xf32>
    %c10 = arith.constant 10 : index
    %c0_36 = arith.constant 0 : index
    %c0_37 = arith.constant 0 : index
    %100 = vector.load %arg4[%c10, %c0_36, %c0_37] : memref<49x4x256xf32, #tpu.memory_space<vmem>>, vector<1x4x256xf32>
    %101 = vector.shape_cast %100 : vector<1x4x256xf32> to vector<4x256xf32>
    %102 = arith.mulf %99, %101 : vector<4x256xf32>
    %103 = arith.addf %96, %102 : vector<4x256xf32>
    %104 = vector.extract_strided_slice %27 {offsets = [0, 225], sizes = [4, 31], strides = [1, 1]} : vector<4x256xf32> to vector<4x31xf32>
    %105 = vector.extract_strided_slice %27 {offsets = [0, 0], sizes = [4, 225], strides = [1, 1]} : vector<4x256xf32> to vector<4x225xf32>
    %106 = tpu.concatenate %104, %105 in 1 : vector<4x31xf32>, vector<4x225xf32> -> vector<4x256xf32>
    %c11 = arith.constant 11 : index
    %c0_38 = arith.constant 0 : index
    %c0_39 = arith.constant 0 : index
    %107 = vector.load %arg4[%c11, %c0_38, %c0_39] : memref<49x4x256xf32, #tpu.memory_space<vmem>>, vector<1x4x256xf32>
    %108 = vector.shape_cast %107 : vector<1x4x256xf32> to vector<4x256xf32>
    %109 = arith.mulf %106, %108 : vector<4x256xf32>
    %110 = arith.addf %103, %109 : vector<4x256xf32>
    %111 = vector.extract_strided_slice %27 {offsets = [0, 226], sizes = [4, 30], strides = [1, 1]} : vector<4x256xf32> to vector<4x30xf32>
    %112 = vector.extract_strided_slice %27 {offsets = [0, 0], sizes = [4, 226], strides = [1, 1]} : vector<4x256xf32> to vector<4x226xf32>
    %113 = tpu.concatenate %111, %112 in 1 : vector<4x30xf32>, vector<4x226xf32> -> vector<4x256xf32>
    %c12 = arith.constant 12 : index
    %c0_40 = arith.constant 0 : index
    %c0_41 = arith.constant 0 : index
    %114 = vector.load %arg4[%c12, %c0_40, %c0_41] : memref<49x4x256xf32, #tpu.memory_space<vmem>>, vector<1x4x256xf32>
    %115 = vector.shape_cast %114 : vector<1x4x256xf32> to vector<4x256xf32>
    %116 = arith.mulf %113, %115 : vector<4x256xf32>
    %117 = arith.addf %110, %116 : vector<4x256xf32>
    %118 = vector.extract_strided_slice %27 {offsets = [0, 227], sizes = [4, 29], strides = [1, 1]} : vector<4x256xf32> to vector<4x29xf32>
    %119 = vector.extract_strided_slice %27 {offsets = [0, 0], sizes = [4, 227], strides = [1, 1]} : vector<4x256xf32> to vector<4x227xf32>
    %120 = tpu.concatenate %118, %119 in 1 : vector<4x29xf32>, vector<4x227xf32> -> vector<4x256xf32>
    %c13 = arith.constant 13 : index
    %c0_42 = arith.constant 0 : index
    %c0_43 = arith.constant 0 : index
    %121 = vector.load %arg4[%c13, %c0_42, %c0_43] : memref<49x4x256xf32, #tpu.memory_space<vmem>>, vector<1x4x256xf32>
    %122 = vector.shape_cast %121 : vector<1x4x256xf32> to vector<4x256xf32>
    %123 = arith.mulf %120, %122 : vector<4x256xf32>
    %124 = arith.addf %117, %123 : vector<4x256xf32>
    %125 = vector.extract_strided_slice %27 {offsets = [0, 237], sizes = [4, 19], strides = [1, 1]} : vector<4x256xf32> to vector<4x19xf32>
    %126 = vector.extract_strided_slice %27 {offsets = [0, 0], sizes = [4, 237], strides = [1, 1]} : vector<4x256xf32> to vector<4x237xf32>
    %127 = tpu.concatenate %125, %126 in 1 : vector<4x19xf32>, vector<4x237xf32> -> vector<4x256xf32>
    %c14 = arith.constant 14 : index
    %c0_44 = arith.constant 0 : index
    %c0_45 = arith.constant 0 : index
    %128 = vector.load %arg4[%c14, %c0_44, %c0_45] : memref<49x4x256xf32, #tpu.memory_space<vmem>>, vector<1x4x256xf32>
    %129 = vector.shape_cast %128 : vector<1x4x256xf32> to vector<4x256xf32>
    %130 = arith.mulf %127, %129 : vector<4x256xf32>
    %131 = arith.addf %124, %130 : vector<4x256xf32>
    %132 = vector.extract_strided_slice %27 {offsets = [0, 238], sizes = [4, 18], strides = [1, 1]} : vector<4x256xf32> to vector<4x18xf32>
    %133 = vector.extract_strided_slice %27 {offsets = [0, 0], sizes = [4, 238], strides = [1, 1]} : vector<4x256xf32> to vector<4x238xf32>
    %134 = tpu.concatenate %132, %133 in 1 : vector<4x18xf32>, vector<4x238xf32> -> vector<4x256xf32>
    %c15 = arith.constant 15 : index
    %c0_46 = arith.constant 0 : index
    %c0_47 = arith.constant 0 : index
    %135 = vector.load %arg4[%c15, %c0_46, %c0_47] : memref<49x4x256xf32, #tpu.memory_space<vmem>>, vector<1x4x256xf32>
    %136 = vector.shape_cast %135 : vector<1x4x256xf32> to vector<4x256xf32>
    %137 = arith.mulf %134, %136 : vector<4x256xf32>
    %138 = arith.addf %131, %137 : vector<4x256xf32>
    %139 = vector.extract_strided_slice %27 {offsets = [0, 239], sizes = [4, 17], strides = [1, 1]} : vector<4x256xf32> to vector<4x17xf32>
    %140 = vector.extract_strided_slice %27 {offsets = [0, 0], sizes = [4, 239], strides = [1, 1]} : vector<4x256xf32> to vector<4x239xf32>
    %141 = tpu.concatenate %139, %140 in 1 : vector<4x17xf32>, vector<4x239xf32> -> vector<4x256xf32>
    %c16 = arith.constant 16 : index
    %c0_48 = arith.constant 0 : index
    %c0_49 = arith.constant 0 : index
    %142 = vector.load %arg4[%c16, %c0_48, %c0_49] : memref<49x4x256xf32, #tpu.memory_space<vmem>>, vector<1x4x256xf32>
    %143 = vector.shape_cast %142 : vector<1x4x256xf32> to vector<4x256xf32>
    %144 = arith.mulf %141, %143 : vector<4x256xf32>
    %145 = arith.addf %138, %144 : vector<4x256xf32>
    %146 = vector.extract_strided_slice %27 {offsets = [0, 240], sizes = [4, 16], strides = [1, 1]} : vector<4x256xf32> to vector<4x16xf32>
    %147 = vector.extract_strided_slice %27 {offsets = [0, 0], sizes = [4, 240], strides = [1, 1]} : vector<4x256xf32> to vector<4x240xf32>
    %148 = tpu.concatenate %146, %147 in 1 : vector<4x16xf32>, vector<4x240xf32> -> vector<4x256xf32>
    %c17 = arith.constant 17 : index
    %c0_50 = arith.constant 0 : index
    %c0_51 = arith.constant 0 : index
    %149 = vector.load %arg4[%c17, %c0_50, %c0_51] : memref<49x4x256xf32, #tpu.memory_space<vmem>>, vector<1x4x256xf32>
    %150 = vector.shape_cast %149 : vector<1x4x256xf32> to vector<4x256xf32>
    %151 = arith.mulf %148, %150 : vector<4x256xf32>
    %152 = arith.addf %145, %151 : vector<4x256xf32>
    %153 = vector.extract_strided_slice %27 {offsets = [0, 241], sizes = [4, 15], strides = [1, 1]} : vector<4x256xf32> to vector<4x15xf32>
    %154 = vector.extract_strided_slice %27 {offsets = [0, 0], sizes = [4, 241], strides = [1, 1]} : vector<4x256xf32> to vector<4x241xf32>
    %155 = tpu.concatenate %153, %154 in 1 : vector<4x15xf32>, vector<4x241xf32> -> vector<4x256xf32>
    %c18 = arith.constant 18 : index
    %c0_52 = arith.constant 0 : index
    %c0_53 = arith.constant 0 : index
    %156 = vector.load %arg4[%c18, %c0_52, %c0_53] : memref<49x4x256xf32, #tpu.memory_space<vmem>>, vector<1x4x256xf32>
    %157 = vector.shape_cast %156 : vector<1x4x256xf32> to vector<4x256xf32>
    %158 = arith.mulf %155, %157 : vector<4x256xf32>
    %159 = arith.addf %152, %158 : vector<4x256xf32>
    %160 = vector.extract_strided_slice %27 {offsets = [0, 242], sizes = [4, 14], strides = [1, 1]} : vector<4x256xf32> to vector<4x14xf32>
    %161 = vector.extract_strided_slice %27 {offsets = [0, 0], sizes = [4, 242], strides = [1, 1]} : vector<4x256xf32> to vector<4x242xf32>
    %162 = tpu.concatenate %160, %161 in 1 : vector<4x14xf32>, vector<4x242xf32> -> vector<4x256xf32>
    %c19 = arith.constant 19 : index
    %c0_54 = arith.constant 0 : index
    %c0_55 = arith.constant 0 : index
    %163 = vector.load %arg4[%c19, %c0_54, %c0_55] : memref<49x4x256xf32, #tpu.memory_space<vmem>>, vector<1x4x256xf32>
    %164 = vector.shape_cast %163 : vector<1x4x256xf32> to vector<4x256xf32>
    %165 = arith.mulf %162, %164 : vector<4x256xf32>
    %166 = arith.addf %159, %165 : vector<4x256xf32>
    %167 = vector.extract_strided_slice %27 {offsets = [0, 243], sizes = [4, 13], strides = [1, 1]} : vector<4x256xf32> to vector<4x13xf32>
    %168 = vector.extract_strided_slice %27 {offsets = [0, 0], sizes = [4, 243], strides = [1, 1]} : vector<4x256xf32> to vector<4x243xf32>
    %169 = tpu.concatenate %167, %168 in 1 : vector<4x13xf32>, vector<4x243xf32> -> vector<4x256xf32>
    %c20 = arith.constant 20 : index
    %c0_56 = arith.constant 0 : index
    %c0_57 = arith.constant 0 : index
    %170 = vector.load %arg4[%c20, %c0_56, %c0_57] : memref<49x4x256xf32, #tpu.memory_space<vmem>>, vector<1x4x256xf32>
    %171 = vector.shape_cast %170 : vector<1x4x256xf32> to vector<4x256xf32>
    %172 = arith.mulf %169, %171 : vector<4x256xf32>
    %173 = arith.addf %166, %172 : vector<4x256xf32>
    %174 = vector.extract_strided_slice %27 {offsets = [0, 253], sizes = [4, 3], strides = [1, 1]} : vector<4x256xf32> to vector<4x3xf32>
    %175 = vector.extract_strided_slice %27 {offsets = [0, 0], sizes = [4, 253], strides = [1, 1]} : vector<4x256xf32> to vector<4x253xf32>
    %176 = tpu.concatenate %174, %175 in 1 : vector<4x3xf32>, vector<4x253xf32> -> vector<4x256xf32>
    %c21 = arith.constant 21 : index
    %c0_58 = arith.constant 0 : index
    %c0_59 = arith.constant 0 : index
    %177 = vector.load %arg4[%c21, %c0_58, %c0_59] : memref<49x4x256xf32, #tpu.memory_space<vmem>>, vector<1x4x256xf32>
    %178 = vector.shape_cast %177 : vector<1x4x256xf32> to vector<4x256xf32>
    %179 = arith.mulf %176, %178 : vector<4x256xf32>
    %180 = arith.addf %173, %179 : vector<4x256xf32>
    %181 = vector.extract_strided_slice %27 {offsets = [0, 254], sizes = [4, 2], strides = [1, 1]} : vector<4x256xf32> to vector<4x2xf32>
    %182 = vector.extract_strided_slice %27 {offsets = [0, 0], sizes = [4, 254], strides = [1, 1]} : vector<4x256xf32> to vector<4x254xf32>
    %183 = tpu.concatenate %181, %182 in 1 : vector<4x2xf32>, vector<4x254xf32> -> vector<4x256xf32>
    %c22 = arith.constant 22 : index
    %c0_60 = arith.constant 0 : index
    %c0_61 = arith.constant 0 : index
    %184 = vector.load %arg4[%c22, %c0_60, %c0_61] : memref<49x4x256xf32, #tpu.memory_space<vmem>>, vector<1x4x256xf32>
    %185 = vector.shape_cast %184 : vector<1x4x256xf32> to vector<4x256xf32>
    %186 = arith.mulf %183, %185 : vector<4x256xf32>
    %187 = arith.addf %180, %186 : vector<4x256xf32>
    %188 = vector.extract_strided_slice %27 {offsets = [0, 255], sizes = [4, 1], strides = [1, 1]} : vector<4x256xf32> to vector<4x1xf32>
    %189 = vector.extract_strided_slice %27 {offsets = [0, 0], sizes = [4, 255], strides = [1, 1]} : vector<4x256xf32> to vector<4x255xf32>
    %190 = tpu.concatenate %188, %189 in 1 : vector<4x1xf32>, vector<4x255xf32> -> vector<4x256xf32>
    %c23 = arith.constant 23 : index
    %c0_62 = arith.constant 0 : index
    %c0_63 = arith.constant 0 : index
    %191 = vector.load %arg4[%c23, %c0_62, %c0_63] : memref<49x4x256xf32, #tpu.memory_space<vmem>>, vector<1x4x256xf32>
    %192 = vector.shape_cast %191 : vector<1x4x256xf32> to vector<4x256xf32>
    %193 = arith.mulf %190, %192 : vector<4x256xf32>
    %194 = arith.addf %187, %193 : vector<4x256xf32>
    %c24 = arith.constant 24 : index
    %c0_64 = arith.constant 0 : index
    %c0_65 = arith.constant 0 : index
    %195 = vector.load %arg4[%c24, %c0_64, %c0_65] : memref<49x4x256xf32, #tpu.memory_space<vmem>>, vector<1x4x256xf32>
    %196 = vector.shape_cast %195 : vector<1x4x256xf32> to vector<4x256xf32>
    %197 = arith.mulf %27, %196 : vector<4x256xf32>
    %198 = arith.addf %194, %197 : vector<4x256xf32>
    %199 = vector.extract_strided_slice %27 {offsets = [0, 1], sizes = [4, 255], strides = [1, 1]} : vector<4x256xf32> to vector<4x255xf32>
    %200 = vector.extract_strided_slice %27 {offsets = [0, 0], sizes = [4, 1], strides = [1, 1]} : vector<4x256xf32> to vector<4x1xf32>
    %201 = tpu.concatenate %199, %200 in 1 : vector<4x255xf32>, vector<4x1xf32> -> vector<4x256xf32>
    %c25 = arith.constant 25 : index
    %c0_66 = arith.constant 0 : index
    %c0_67 = arith.constant 0 : index
    %202 = vector.load %arg4[%c25, %c0_66, %c0_67] : memref<49x4x256xf32, #tpu.memory_space<vmem>>, vector<1x4x256xf32>
    %203 = vector.shape_cast %202 : vector<1x4x256xf32> to vector<4x256xf32>
    %204 = arith.mulf %201, %203 : vector<4x256xf32>
    %205 = arith.addf %198, %204 : vector<4x256xf32>
    %206 = vector.extract_strided_slice %27 {offsets = [0, 2], sizes = [4, 254], strides = [1, 1]} : vector<4x256xf32> to vector<4x254xf32>
    %207 = vector.extract_strided_slice %27 {offsets = [0, 0], sizes = [4, 2], strides = [1, 1]} : vector<4x256xf32> to vector<4x2xf32>
    %208 = tpu.concatenate %206, %207 in 1 : vector<4x254xf32>, vector<4x2xf32> -> vector<4x256xf32>
    %c26 = arith.constant 26 : index
    %c0_68 = arith.constant 0 : index
    %c0_69 = arith.constant 0 : index
    %209 = vector.load %arg4[%c26, %c0_68, %c0_69] : memref<49x4x256xf32, #tpu.memory_space<vmem>>, vector<1x4x256xf32>
    %210 = vector.shape_cast %209 : vector<1x4x256xf32> to vector<4x256xf32>
    %211 = arith.mulf %208, %210 : vector<4x256xf32>
    %212 = arith.addf %205, %211 : vector<4x256xf32>
    %213 = vector.extract_strided_slice %27 {offsets = [0, 3], sizes = [4, 253], strides = [1, 1]} : vector<4x256xf32> to vector<4x253xf32>
    %214 = vector.extract_strided_slice %27 {offsets = [0, 0], sizes = [4, 3], strides = [1, 1]} : vector<4x256xf32> to vector<4x3xf32>
    %215 = tpu.concatenate %213, %214 in 1 : vector<4x253xf32>, vector<4x3xf32> -> vector<4x256xf32>
    %c27 = arith.constant 27 : index
    %c0_70 = arith.constant 0 : index
    %c0_71 = arith.constant 0 : index
    %216 = vector.load %arg4[%c27, %c0_70, %c0_71] : memref<49x4x256xf32, #tpu.memory_space<vmem>>, vector<1x4x256xf32>
    %217 = vector.shape_cast %216 : vector<1x4x256xf32> to vector<4x256xf32>
    %218 = arith.mulf %215, %217 : vector<4x256xf32>
    %219 = arith.addf %212, %218 : vector<4x256xf32>
    %220 = vector.extract_strided_slice %27 {offsets = [0, 13], sizes = [4, 243], strides = [1, 1]} : vector<4x256xf32> to vector<4x243xf32>
    %221 = vector.extract_strided_slice %27 {offsets = [0, 0], sizes = [4, 13], strides = [1, 1]} : vector<4x256xf32> to vector<4x13xf32>
    %222 = tpu.concatenate %220, %221 in 1 : vector<4x243xf32>, vector<4x13xf32> -> vector<4x256xf32>
    %c28 = arith.constant 28 : index
    %c0_72 = arith.constant 0 : index
    %c0_73 = arith.constant 0 : index
    %223 = vector.load %arg4[%c28, %c0_72, %c0_73] : memref<49x4x256xf32, #tpu.memory_space<vmem>>, vector<1x4x256xf32>
    %224 = vector.shape_cast %223 : vector<1x4x256xf32> to vector<4x256xf32>
    %225 = arith.mulf %222, %224 : vector<4x256xf32>
    %226 = arith.addf %219, %225 : vector<4x256xf32>
    %227 = vector.extract_strided_slice %27 {offsets = [0, 14], sizes = [4, 242], strides = [1, 1]} : vector<4x256xf32> to vector<4x242xf32>
    %228 = vector.extract_strided_slice %27 {offsets = [0, 0], sizes = [4, 14], strides = [1, 1]} : vector<4x256xf32> to vector<4x14xf32>
    %229 = tpu.concatenate %227, %228 in 1 : vector<4x242xf32>, vector<4x14xf32> -> vector<4x256xf32>
    %c29 = arith.constant 29 : index
    %c0_74 = arith.constant 0 : index
    %c0_75 = arith.constant 0 : index
    %230 = vector.load %arg4[%c29, %c0_74, %c0_75] : memref<49x4x256xf32, #tpu.memory_space<vmem>>, vector<1x4x256xf32>
    %231 = vector.shape_cast %230 : vector<1x4x256xf32> to vector<4x256xf32>
    %232 = arith.mulf %229, %231 : vector<4x256xf32>
    %233 = arith.addf %226, %232 : vector<4x256xf32>
    %234 = vector.extract_strided_slice %27 {offsets = [0, 15], sizes = [4, 241], strides = [1, 1]} : vector<4x256xf32> to vector<4x241xf32>
    %235 = vector.extract_strided_slice %27 {offsets = [0, 0], sizes = [4, 15], strides = [1, 1]} : vector<4x256xf32> to vector<4x15xf32>
    %236 = tpu.concatenate %234, %235 in 1 : vector<4x241xf32>, vector<4x15xf32> -> vector<4x256xf32>
    %c30 = arith.constant 30 : index
    %c0_76 = arith.constant 0 : index
    %c0_77 = arith.constant 0 : index
    %237 = vector.load %arg4[%c30, %c0_76, %c0_77] : memref<49x4x256xf32, #tpu.memory_space<vmem>>, vector<1x4x256xf32>
    %238 = vector.shape_cast %237 : vector<1x4x256xf32> to vector<4x256xf32>
    %239 = arith.mulf %236, %238 : vector<4x256xf32>
    %240 = arith.addf %233, %239 : vector<4x256xf32>
    %241 = vector.extract_strided_slice %27 {offsets = [0, 16], sizes = [4, 240], strides = [1, 1]} : vector<4x256xf32> to vector<4x240xf32>
    %242 = vector.extract_strided_slice %27 {offsets = [0, 0], sizes = [4, 16], strides = [1, 1]} : vector<4x256xf32> to vector<4x16xf32>
    %243 = tpu.concatenate %241, %242 in 1 : vector<4x240xf32>, vector<4x16xf32> -> vector<4x256xf32>
    %c31 = arith.constant 31 : index
    %c0_78 = arith.constant 0 : index
    %c0_79 = arith.constant 0 : index
    %244 = vector.load %arg4[%c31, %c0_78, %c0_79] : memref<49x4x256xf32, #tpu.memory_space<vmem>>, vector<1x4x256xf32>
    %245 = vector.shape_cast %244 : vector<1x4x256xf32> to vector<4x256xf32>
    %246 = arith.mulf %243, %245 : vector<4x256xf32>
    %247 = arith.addf %240, %246 : vector<4x256xf32>
    %248 = vector.extract_strided_slice %27 {offsets = [0, 17], sizes = [4, 239], strides = [1, 1]} : vector<4x256xf32> to vector<4x239xf32>
    %249 = vector.extract_strided_slice %27 {offsets = [0, 0], sizes = [4, 17], strides = [1, 1]} : vector<4x256xf32> to vector<4x17xf32>
    %250 = tpu.concatenate %248, %249 in 1 : vector<4x239xf32>, vector<4x17xf32> -> vector<4x256xf32>
    %c32 = arith.constant 32 : index
    %c0_80 = arith.constant 0 : index
    %c0_81 = arith.constant 0 : index
    %251 = vector.load %arg4[%c32, %c0_80, %c0_81] : memref<49x4x256xf32, #tpu.memory_space<vmem>>, vector<1x4x256xf32>
    %252 = vector.shape_cast %251 : vector<1x4x256xf32> to vector<4x256xf32>
    %253 = arith.mulf %250, %252 : vector<4x256xf32>
    %254 = arith.addf %247, %253 : vector<4x256xf32>
    %255 = vector.extract_strided_slice %27 {offsets = [0, 18], sizes = [4, 238], strides = [1, 1]} : vector<4x256xf32> to vector<4x238xf32>
    %256 = vector.extract_strided_slice %27 {offsets = [0, 0], sizes = [4, 18], strides = [1, 1]} : vector<4x256xf32> to vector<4x18xf32>
    %257 = tpu.concatenate %255, %256 in 1 : vector<4x238xf32>, vector<4x18xf32> -> vector<4x256xf32>
    %c33 = arith.constant 33 : index
    %c0_82 = arith.constant 0 : index
    %c0_83 = arith.constant 0 : index
    %258 = vector.load %arg4[%c33, %c0_82, %c0_83] : memref<49x4x256xf32, #tpu.memory_space<vmem>>, vector<1x4x256xf32>
    %259 = vector.shape_cast %258 : vector<1x4x256xf32> to vector<4x256xf32>
    %260 = arith.mulf %257, %259 : vector<4x256xf32>
    %261 = arith.addf %254, %260 : vector<4x256xf32>
    %262 = vector.extract_strided_slice %27 {offsets = [0, 19], sizes = [4, 237], strides = [1, 1]} : vector<4x256xf32> to vector<4x237xf32>
    %263 = vector.extract_strided_slice %27 {offsets = [0, 0], sizes = [4, 19], strides = [1, 1]} : vector<4x256xf32> to vector<4x19xf32>
    %264 = tpu.concatenate %262, %263 in 1 : vector<4x237xf32>, vector<4x19xf32> -> vector<4x256xf32>
    %c34 = arith.constant 34 : index
    %c0_84 = arith.constant 0 : index
    %c0_85 = arith.constant 0 : index
    %265 = vector.load %arg4[%c34, %c0_84, %c0_85] : memref<49x4x256xf32, #tpu.memory_space<vmem>>, vector<1x4x256xf32>
    %266 = vector.shape_cast %265 : vector<1x4x256xf32> to vector<4x256xf32>
    %267 = arith.mulf %264, %266 : vector<4x256xf32>
    %268 = arith.addf %261, %267 : vector<4x256xf32>
    %269 = vector.extract_strided_slice %27 {offsets = [0, 29], sizes = [4, 227], strides = [1, 1]} : vector<4x256xf32> to vector<4x227xf32>
    %270 = vector.extract_strided_slice %27 {offsets = [0, 0], sizes = [4, 29], strides = [1, 1]} : vector<4x256xf32> to vector<4x29xf32>
    %271 = tpu.concatenate %269, %270 in 1 : vector<4x227xf32>, vector<4x29xf32> -> vector<4x256xf32>
    %c35 = arith.constant 35 : index
    %c0_86 = arith.constant 0 : index
    %c0_87 = arith.constant 0 : index
    %272 = vector.load %arg4[%c35, %c0_86, %c0_87] : memref<49x4x256xf32, #tpu.memory_space<vmem>>, vector<1x4x256xf32>
    %273 = vector.shape_cast %272 : vector<1x4x256xf32> to vector<4x256xf32>
    %274 = arith.mulf %271, %273 : vector<4x256xf32>
    %275 = arith.addf %268, %274 : vector<4x256xf32>
    %276 = vector.extract_strided_slice %27 {offsets = [0, 30], sizes = [4, 226], strides = [1, 1]} : vector<4x256xf32> to vector<4x226xf32>
    %277 = vector.extract_strided_slice %27 {offsets = [0, 0], sizes = [4, 30], strides = [1, 1]} : vector<4x256xf32> to vector<4x30xf32>
    %278 = tpu.concatenate %276, %277 in 1 : vector<4x226xf32>, vector<4x30xf32> -> vector<4x256xf32>
    %c36 = arith.constant 36 : index
    %c0_88 = arith.constant 0 : index
    %c0_89 = arith.constant 0 : index
    %279 = vector.load %arg4[%c36, %c0_88, %c0_89] : memref<49x4x256xf32, #tpu.memory_space<vmem>>, vector<1x4x256xf32>
    %280 = vector.shape_cast %279 : vector<1x4x256xf32> to vector<4x256xf32>
    %281 = arith.mulf %278, %280 : vector<4x256xf32>
    %282 = arith.addf %275, %281 : vector<4x256xf32>
    %283 = vector.extract_strided_slice %27 {offsets = [0, 31], sizes = [4, 225], strides = [1, 1]} : vector<4x256xf32> to vector<4x225xf32>
    %284 = vector.extract_strided_slice %27 {offsets = [0, 0], sizes = [4, 31], strides = [1, 1]} : vector<4x256xf32> to vector<4x31xf32>
    %285 = tpu.concatenate %283, %284 in 1 : vector<4x225xf32>, vector<4x31xf32> -> vector<4x256xf32>
    %c37 = arith.constant 37 : index
    %c0_90 = arith.constant 0 : index
    %c0_91 = arith.constant 0 : index
    %286 = vector.load %arg4[%c37, %c0_90, %c0_91] : memref<49x4x256xf32, #tpu.memory_space<vmem>>, vector<1x4x256xf32>
    %287 = vector.shape_cast %286 : vector<1x4x256xf32> to vector<4x256xf32>
    %288 = arith.mulf %285, %287 : vector<4x256xf32>
    %289 = arith.addf %282, %288 : vector<4x256xf32>
    %290 = vector.extract_strided_slice %27 {offsets = [0, 32], sizes = [4, 224], strides = [1, 1]} : vector<4x256xf32> to vector<4x224xf32>
    %291 = vector.extract_strided_slice %27 {offsets = [0, 0], sizes = [4, 32], strides = [1, 1]} : vector<4x256xf32> to vector<4x32xf32>
    %292 = tpu.concatenate %290, %291 in 1 : vector<4x224xf32>, vector<4x32xf32> -> vector<4x256xf32>
    %c38 = arith.constant 38 : index
    %c0_92 = arith.constant 0 : index
    %c0_93 = arith.constant 0 : index
    %293 = vector.load %arg4[%c38, %c0_92, %c0_93] : memref<49x4x256xf32, #tpu.memory_space<vmem>>, vector<1x4x256xf32>
    %294 = vector.shape_cast %293 : vector<1x4x256xf32> to vector<4x256xf32>
    %295 = arith.mulf %292, %294 : vector<4x256xf32>
    %296 = arith.addf %289, %295 : vector<4x256xf32>
    %297 = vector.extract_strided_slice %27 {offsets = [0, 33], sizes = [4, 223], strides = [1, 1]} : vector<4x256xf32> to vector<4x223xf32>
    %298 = vector.extract_strided_slice %27 {offsets = [0, 0], sizes = [4, 33], strides = [1, 1]} : vector<4x256xf32> to vector<4x33xf32>
    %299 = tpu.concatenate %297, %298 in 1 : vector<4x223xf32>, vector<4x33xf32> -> vector<4x256xf32>
    %c39 = arith.constant 39 : index
    %c0_94 = arith.constant 0 : index
    %c0_95 = arith.constant 0 : index
    %300 = vector.load %arg4[%c39, %c0_94, %c0_95] : memref<49x4x256xf32, #tpu.memory_space<vmem>>, vector<1x4x256xf32>
    %301 = vector.shape_cast %300 : vector<1x4x256xf32> to vector<4x256xf32>
    %302 = arith.mulf %299, %301 : vector<4x256xf32>
    %303 = arith.addf %296, %302 : vector<4x256xf32>
    %304 = vector.extract_strided_slice %27 {offsets = [0, 34], sizes = [4, 222], strides = [1, 1]} : vector<4x256xf32> to vector<4x222xf32>
    %305 = vector.extract_strided_slice %27 {offsets = [0, 0], sizes = [4, 34], strides = [1, 1]} : vector<4x256xf32> to vector<4x34xf32>
    %306 = tpu.concatenate %304, %305 in 1 : vector<4x222xf32>, vector<4x34xf32> -> vector<4x256xf32>
    %c40 = arith.constant 40 : index
    %c0_96 = arith.constant 0 : index
    %c0_97 = arith.constant 0 : index
    %307 = vector.load %arg4[%c40, %c0_96, %c0_97] : memref<49x4x256xf32, #tpu.memory_space<vmem>>, vector<1x4x256xf32>
    %308 = vector.shape_cast %307 : vector<1x4x256xf32> to vector<4x256xf32>
    %309 = arith.mulf %306, %308 : vector<4x256xf32>
    %310 = arith.addf %303, %309 : vector<4x256xf32>
    %311 = vector.extract_strided_slice %27 {offsets = [0, 35], sizes = [4, 221], strides = [1, 1]} : vector<4x256xf32> to vector<4x221xf32>
    %312 = vector.extract_strided_slice %27 {offsets = [0, 0], sizes = [4, 35], strides = [1, 1]} : vector<4x256xf32> to vector<4x35xf32>
    %313 = tpu.concatenate %311, %312 in 1 : vector<4x221xf32>, vector<4x35xf32> -> vector<4x256xf32>
    %c41 = arith.constant 41 : index
    %c0_98 = arith.constant 0 : index
    %c0_99 = arith.constant 0 : index
    %314 = vector.load %arg4[%c41, %c0_98, %c0_99] : memref<49x4x256xf32, #tpu.memory_space<vmem>>, vector<1x4x256xf32>
    %315 = vector.shape_cast %314 : vector<1x4x256xf32> to vector<4x256xf32>
    %316 = arith.mulf %313, %315 : vector<4x256xf32>
    %317 = arith.addf %310, %316 : vector<4x256xf32>
    %318 = vector.extract_strided_slice %27 {offsets = [0, 45], sizes = [4, 211], strides = [1, 1]} : vector<4x256xf32> to vector<4x211xf32>
    %319 = vector.extract_strided_slice %27 {offsets = [0, 0], sizes = [4, 45], strides = [1, 1]} : vector<4x256xf32> to vector<4x45xf32>
    %320 = tpu.concatenate %318, %319 in 1 : vector<4x211xf32>, vector<4x45xf32> -> vector<4x256xf32>
    %c42 = arith.constant 42 : index
    %c0_100 = arith.constant 0 : index
    %c0_101 = arith.constant 0 : index
    %321 = vector.load %arg4[%c42, %c0_100, %c0_101] : memref<49x4x256xf32, #tpu.memory_space<vmem>>, vector<1x4x256xf32>
    %322 = vector.shape_cast %321 : vector<1x4x256xf32> to vector<4x256xf32>
    %323 = arith.mulf %320, %322 : vector<4x256xf32>
    %324 = arith.addf %317, %323 : vector<4x256xf32>
    %325 = vector.extract_strided_slice %27 {offsets = [0, 46], sizes = [4, 210], strides = [1, 1]} : vector<4x256xf32> to vector<4x210xf32>
    %326 = vector.extract_strided_slice %27 {offsets = [0, 0], sizes = [4, 46], strides = [1, 1]} : vector<4x256xf32> to vector<4x46xf32>
    %327 = tpu.concatenate %325, %326 in 1 : vector<4x210xf32>, vector<4x46xf32> -> vector<4x256xf32>
    %c43 = arith.constant 43 : index
    %c0_102 = arith.constant 0 : index
    %c0_103 = arith.constant 0 : index
    %328 = vector.load %arg4[%c43, %c0_102, %c0_103] : memref<49x4x256xf32, #tpu.memory_space<vmem>>, vector<1x4x256xf32>
    %329 = vector.shape_cast %328 : vector<1x4x256xf32> to vector<4x256xf32>
    %330 = arith.mulf %327, %329 : vector<4x256xf32>
    %331 = arith.addf %324, %330 : vector<4x256xf32>
    %332 = vector.extract_strided_slice %27 {offsets = [0, 47], sizes = [4, 209], strides = [1, 1]} : vector<4x256xf32> to vector<4x209xf32>
    %333 = vector.extract_strided_slice %27 {offsets = [0, 0], sizes = [4, 47], strides = [1, 1]} : vector<4x256xf32> to vector<4x47xf32>
    %334 = tpu.concatenate %332, %333 in 1 : vector<4x209xf32>, vector<4x47xf32> -> vector<4x256xf32>
    %c44 = arith.constant 44 : index
    %c0_104 = arith.constant 0 : index
    %c0_105 = arith.constant 0 : index
    %335 = vector.load %arg4[%c44, %c0_104, %c0_105] : memref<49x4x256xf32, #tpu.memory_space<vmem>>, vector<1x4x256xf32>
    %336 = vector.shape_cast %335 : vector<1x4x256xf32> to vector<4x256xf32>
    %337 = arith.mulf %334, %336 : vector<4x256xf32>
    %338 = arith.addf %331, %337 : vector<4x256xf32>
    %339 = vector.extract_strided_slice %27 {offsets = [0, 48], sizes = [4, 208], strides = [1, 1]} : vector<4x256xf32> to vector<4x208xf32>
    %340 = vector.extract_strided_slice %27 {offsets = [0, 0], sizes = [4, 48], strides = [1, 1]} : vector<4x256xf32> to vector<4x48xf32>
    %341 = tpu.concatenate %339, %340 in 1 : vector<4x208xf32>, vector<4x48xf32> -> vector<4x256xf32>
    %c45 = arith.constant 45 : index
    %c0_106 = arith.constant 0 : index
    %c0_107 = arith.constant 0 : index
    %342 = vector.load %arg4[%c45, %c0_106, %c0_107] : memref<49x4x256xf32, #tpu.memory_space<vmem>>, vector<1x4x256xf32>
    %343 = vector.shape_cast %342 : vector<1x4x256xf32> to vector<4x256xf32>
    %344 = arith.mulf %341, %343 : vector<4x256xf32>
    %345 = arith.addf %338, %344 : vector<4x256xf32>
    %346 = vector.extract_strided_slice %27 {offsets = [0, 49], sizes = [4, 207], strides = [1, 1]} : vector<4x256xf32> to vector<4x207xf32>
    %347 = vector.extract_strided_slice %27 {offsets = [0, 0], sizes = [4, 49], strides = [1, 1]} : vector<4x256xf32> to vector<4x49xf32>
    %348 = tpu.concatenate %346, %347 in 1 : vector<4x207xf32>, vector<4x49xf32> -> vector<4x256xf32>
    %c46 = arith.constant 46 : index
    %c0_108 = arith.constant 0 : index
    %c0_109 = arith.constant 0 : index
    %349 = vector.load %arg4[%c46, %c0_108, %c0_109] : memref<49x4x256xf32, #tpu.memory_space<vmem>>, vector<1x4x256xf32>
    %350 = vector.shape_cast %349 : vector<1x4x256xf32> to vector<4x256xf32>
    %351 = arith.mulf %348, %350 : vector<4x256xf32>
    %352 = arith.addf %345, %351 : vector<4x256xf32>
    %353 = vector.extract_strided_slice %27 {offsets = [0, 50], sizes = [4, 206], strides = [1, 1]} : vector<4x256xf32> to vector<4x206xf32>
    %354 = vector.extract_strided_slice %27 {offsets = [0, 0], sizes = [4, 50], strides = [1, 1]} : vector<4x256xf32> to vector<4x50xf32>
    %355 = tpu.concatenate %353, %354 in 1 : vector<4x206xf32>, vector<4x50xf32> -> vector<4x256xf32>
    %c47 = arith.constant 47 : index
    %c0_110 = arith.constant 0 : index
    %c0_111 = arith.constant 0 : index
    %356 = vector.load %arg4[%c47, %c0_110, %c0_111] : memref<49x4x256xf32, #tpu.memory_space<vmem>>, vector<1x4x256xf32>
    %357 = vector.shape_cast %356 : vector<1x4x256xf32> to vector<4x256xf32>
    %358 = arith.mulf %355, %357 : vector<4x256xf32>
    %359 = arith.addf %352, %358 : vector<4x256xf32>
    %360 = vector.extract_strided_slice %27 {offsets = [0, 51], sizes = [4, 205], strides = [1, 1]} : vector<4x256xf32> to vector<4x205xf32>
    %361 = vector.extract_strided_slice %27 {offsets = [0, 0], sizes = [4, 51], strides = [1, 1]} : vector<4x256xf32> to vector<4x51xf32>
    %362 = tpu.concatenate %360, %361 in 1 : vector<4x205xf32>, vector<4x51xf32> -> vector<4x256xf32>
    %c48 = arith.constant 48 : index
    %c0_112 = arith.constant 0 : index
    %c0_113 = arith.constant 0 : index
    %363 = vector.load %arg4[%c48, %c0_112, %c0_113] : memref<49x4x256xf32, #tpu.memory_space<vmem>>, vector<1x4x256xf32>
    %364 = vector.shape_cast %363 : vector<1x4x256xf32> to vector<4x256xf32>
    %365 = arith.mulf %362, %364 : vector<4x256xf32>
    %366 = arith.addf %359, %365 : vector<4x256xf32>
    %367 = vector.extract_strided_slice %366 {offsets = [0, 0], sizes = [2, 256], strides = [1, 1]} : vector<4x256xf32> to vector<2x256xf32>
    %368 = vector.extract_strided_slice %366 {offsets = [2, 0], sizes = [2, 256], strides = [1, 1]} : vector<4x256xf32> to vector<2x256xf32>
    %369 = arith.addf %367, %368 : vector<2x256xf32>
    %c0_114 = arith.constant 0 : index
    %c0_115 = arith.constant 0 : index
    %370 = memref.load %arg5[%c0_114, %c0_115] : memref<1x1xf32, #tpu.memory_space<smem>>
    %371 = vector.broadcast %370 : f32 to vector<2x256xf32>
    %372 = arith.addf %369, %371 : vector<2x256xf32>
    %373 = arith.negf %372 : vector<2x256xf32>
    %374 = math.exp %373 : vector<2x256xf32>
    %cst_116 = arith.constant 1.000000e+00 : f32
    %375 = vector.broadcast %cst_116 : f32 to vector<2x256xf32>
    %376 = arith.addf %375, %374 : vector<2x256xf32>
    %377 = arith.divf %375, %376 : vector<2x256xf32>
    %378 = vector.shape_cast %377 : vector<2x256xf32> to vector<2x1x256xf32>
    %379 = vector.broadcast %378 : vector<2x1x256xf32> to vector<2x32x256xf32>
    %380 = arith.mulf %22, %379 : vector<2x32x256xf32>
    %381 = arith.addf %380, %0 : vector<2x32x256xf32>
    %c0_117 = arith.constant 0 : index
    %c0_118 = arith.constant 0 : index
    %c0_119 = arith.constant 0 : index
    %382 = vector.load %arg6[%c0_117, %c0_118, %c0_119] : memref<2x32x256xf32, #tpu.memory_space<vmem>>, vector<2x32x256xf32>
    tpu.vector_store %arg6[%c0_117, %c0_118, %c0_119], %381 {strides = array<i32>} : memref<2x32x256xf32, #tpu.memory_space<vmem>>, vector<2x32x256xf32>,
    return
  }
  func.func @transform_0(%arg0: i32) -> (i32, i32, i32) {
    %c0_i32 = arith.constant 0 : i32
    %c0_i32_0 = arith.constant 0 : i32
    %c0_i32_1 = arith.constant 0 : i32
    return %arg0, %c0_i32, %c0_i32_0 : i32, i32, i32
  }
  func.func @transform_1(%arg0: i32) -> (i32, i32) {
    %c0_i32 = arith.constant 0 : i32
    %c0_i32_0 = arith.constant 0 : i32
    %c0_i32_1 = arith.constant 0 : i32
    return %c0_i32, %c0_i32_0 : i32, i32
  }
  func.func @transform_2(%arg0: i32) -> (i32, i32) {
    %c0_i32 = arith.constant 0 : i32
    %c0_i32_0 = arith.constant 0 : i32
    %c0_i32_1 = arith.constant 0 : i32
    return %c0_i32, %c0_i32_0 : i32, i32
  }
  func.func @transform_3(%arg0: i32) -> (i32, i32, i32) {
    %c0_i32 = arith.constant 0 : i32
    %c0_i32_0 = arith.constant 0 : i32
    %c0_i32_1 = arith.constant 0 : i32
    %c0_i32_2 = arith.constant 0 : i32
    return %c0_i32, %c0_i32_0, %c0_i32_1 : i32, i32, i32
  }
  func.func @transform_4(%arg0: i32) -> (i32, i32) {
    %c0_i32 = arith.constant 0 : i32
    %c0_i32_0 = arith.constant 0 : i32
    %c0_i32_1 = arith.constant 0 : i32
    return %c0_i32, %c0_i32_0 : i32, i32
  }
  func.func @transform_5(%arg0: i32) -> (i32, i32, i32) {
    %c0_i32 = arith.constant 0 : i32
    %c0_i32_0 = arith.constant 0 : i32
    %c0_i32_1 = arith.constant 0 : i32
    return %arg0, %c0_i32, %c0_i32_0 : i32, i32, i32
  }
}

</mosaic_0001>

<llo_original>
// kernel: run.1
$region0: #{run.1}
  #allocation0 [shape = 'u32[]', space=smem, size = 0x4, offset = 0x4, fixed_abs, tag = 'smem constant byte address 0x4 - core index']
  #allocation1 [shape = 'u32[144,128]{1,0:T(1,128)}', space=vmem, size = 0x12000, scoped, tag = 'internal scratch']
  #allocation2 [shape = 'f32[1,1]{1,0:T(1,128)S(6)}', space=smem, size = 0x200, scoped, tag = 'scoped memory for run.1']
  %s0 = inlined_call_operand.vmem [shape: f32[2,32,256], index: 0, kind: input, shape index: {}]
  %s1 = inlined_call_operand.vmem [shape: f32[32,8], index: 1, kind: input, shape index: {}]
  %s2 = inlined_call_operand.vmem [shape: f32[8,32], index: 2, kind: input, shape index: {}]
  %s3 = inlined_call_operand.vmem [shape: f32[49,4,256], index: 3, kind: input, shape index: {}]
  %s4 = inlined_call_operand.<no memory space> [shape: f32[1,1], index: 4, kind: input, shape index: {}]
  %s5 = inlined_call_operand.vmem [shape: f32[2,32,256], index: 5, kind: output, shape index: {}]
  %s6 = sld [smem:[#allocation0]]
  $region30: #{run.1} parent=0
    _
  %s8 = ssub.s32 1, %s6
  %s9 = scalar_select 0, %s8, %s6
  %10 = sst [smem:[#allocation2]] %s4
  // Predicated region
  $region2: #{run.1} parent=0 // pred_check
    _
  $region3: #{run.1} parent=0 // pred_check_branch
    %12 = sbr.rel (0) target = $region5
  $region4: #{run.1} parent=0 // pred_region
    _
  $region5: #{run.1} parent=0 // pred_fallthru
    _
  // Predicated region
  $region6: #{run.1} parent=0 // pred_check
    _
  $region7: #{run.1} parent=0 // pred_check_branch
    %14 = sbr.rel (0) target = $region9
  $region8: #{run.1} parent=0 // pred_region
    _
  $region9: #{run.1} parent=0 // pred_fallthru
    _
  // Predicated region
  $region10: #{run.1} parent=0 // pred_check
    _
  $region11: #{run.1} parent=0 // pred_check_branch
    %16 = sbr.rel (0) target = $region13
  $region12: #{run.1} parent=0 // pred_region
    _
  $region13: #{run.1} parent=0 // pred_fallthru
    _
  // Predicated region
  $region14: #{run.1} parent=0 // pred_check
    _
  $region15: #{run.1} parent=0 // pred_check_branch
    %18 = sbr.rel (0) target = $region17
  $region16: #{run.1} parent=0 // pred_region
    _
  $region17: #{run.1} parent=0 // pred_fallthru
    _
  // Predicated region
  $region18: #{run.1} parent=0 // pred_check
    _
  $region19: #{run.1} parent=0 // pred_check_branch
    %20 = sbr.rel (0) target = $region21
  $region20: #{run.1} parent=0 // pred_region
    _
  $region21: #{run.1} parent=0 // pred_fallthru
    _
  %v21 = vld [vmem:[%s0] sm:$0xff]
  %v22 = vld [vmem:[%s0 + $0x8] sm:$0xff]
  %v23 = vld [vmem:[%s0 + $0x10] sm:$0xff]
  %v24 = vld [vmem:[%s0 + $0x18] sm:$0xff]
  %v25 = vld [vmem:[%s0 + $0x20] sm:$0xff]
  %v26 = vld [vmem:[%s0 + $0x28] sm:$0xff]
  %v27 = vld [vmem:[%s0 + $0x30] sm:$0xff]
  %v28 = vld [vmem:[%s0 + $0x38] sm:$0xff]
  %v29 = vld [vmem:[%s0 + $0x40] sm:$0xff]
  %v30 = vld [vmem:[%s0 + $0x48] sm:$0xff]
  %v31 = vld [vmem:[%s0 + $0x50] sm:$0xff]
  %v32 = vld [vmem:[%s0 + $0x58] sm:$0xff]
  %v33 = vld [vmem:[%s0 + $0x60] sm:$0xff]
  %v34 = vld [vmem:[%s0 + $0x68] sm:$0xff]
  %v35 = vld [vmem:[%s0 + $0x70] sm:$0xff]
  %v36 = vld [vmem:[%s0 + $0x78] sm:$0xff]
  %v37 = vmax.f32 %v21, %v22
  %38 = vmax.xlane.f32.xlu0 %v37
  %v39 = vpop.xlane.xlu0 %38
  %v40 = vmax.f32 %v23, %v24
  %41 = vmax.xlane.f32.xlu0 %v40
  %v42 = vpop.xlane.xlu0 %41
  %v43 = vmax.f32 %v25, %v26
  %44 = vmax.xlane.f32.xlu0 %v43
  %v45 = vpop.xlane.xlu0 %44
  %v46 = vmax.f32 %v27, %v28
  %47 = vmax.xlane.f32.xlu0 %v46
  %v48 = vpop.xlane.xlu0 %47
  %v49 = vmax.f32 %v29, %v30
  %50 = vmax.xlane.f32.xlu0 %v49
  %v51 = vpop.xlane.xlu0 %50
  %v52 = vmax.f32 %v31, %v32
  %53 = vmax.xlane.f32.xlu0 %v52
  %v54 = vpop.xlane.xlu0 %53
  %v55 = vmax.f32 %v33, %v34
  %56 = vmax.xlane.f32.xlu0 %v55
  %v57 = vpop.xlane.xlu0 %56
  %v58 = vmax.f32 %v35, %v36
  %59 = vmax.xlane.f32.xlu0 %v58
  %v60 = vpop.xlane.xlu0 %59
  %v61 = vadd.f32 %v21, %v22
  %62 = vadd.xlane.f32.xlu0 %v61
  %v63 = vpop.xlane.xlu0 %62
  %v64 = vadd.f32 %v23, %v24
  %65 = vadd.xlane.f32.xlu0 %v64
  %v66 = vpop.xlane.xlu0 %65
  %v67 = vadd.f32 %v25, %v26
  %68 = vadd.xlane.f32.xlu0 %v67
  %v69 = vpop.xlane.xlu0 %68
  %v70 = vadd.f32 %v27, %v28
  %71 = vadd.xlane.f32.xlu0 %v70
  %v72 = vpop.xlane.xlu0 %71
  %v73 = vadd.f32 %v29, %v30
  %74 = vadd.xlane.f32.xlu0 %v73
  %v75 = vpop.xlane.xlu0 %74
  %v76 = vadd.f32 %v31, %v32
  %77 = vadd.xlane.f32.xlu0 %v76
  %v78 = vpop.xlane.xlu0 %77
  %v79 = vadd.f32 %v33, %v34
  %80 = vadd.xlane.f32.xlu0 %v79
  %v81 = vpop.xlane.xlu0 %80
  %v82 = vadd.f32 %v35, %v36
  %83 = vadd.xlane.f32.xlu0 %v82
  %v84 = vpop.xlane.xlu0 %83
  %v85 = vmul.f32 %v63, 0.00390625
  %v86 = vmul.f32 %v66, 0.00390625
  %v87 = vmul.f32 %v69, 0.00390625
  %v88 = vmul.f32 %v72, 0.00390625
  %v89 = vmul.f32 %v75, 0.00390625
  %v90 = vmul.f32 %v78, 0.00390625
  %v91 = vmul.f32 %v81, 0.00390625
  %v92 = vmul.f32 %v84, 0.00390625
  %v101 = vlaneseq
  %v102 = vand.u32 %v101, 127
  %v103 = vlaneseq
  %v104 = vshrl.u32 %v103, 7
  %v105 = vsub.s32 %v102, %v104
  %v106 = vrot.slane %v39, %v105
  %v107 = vadd.s32 %v102, 4294967288
  %v108 = vlaneseq
  %v109 = vshrl.u32 %v108, 7
  %v110 = vsub.s32 %v107, %v109
  %v111 = vrot.slane %v42, %v110
  %vm112 = vcmask 130112
  %v113 = vsel %vm112, %v111, %v106
  %v114 = vadd.s32 %v102, 4294967280
  %v115 = vlaneseq
  %v116 = vshrl.u32 %v115, 7
  %v117 = vsub.s32 %v114, %v116
  %v118 = vrot.slane %v45, %v117
  %vm119 = vcmask 195712
  %v120 = vsel %vm119, %v118, %v113
  %v121 = vadd.s32 %v102, 4294967272
  %v122 = vlaneseq
  %v123 = vshrl.u32 %v122, 7
  %v124 = vsub.s32 %v121, %v123
  %v125 = vrot.slane %v48, %v124
  %vm126 = vcmask 261312
  %v127 = vsel %vm126, %v125, %v120
  %v128 = vlaneseq
  %v129 = vshrl.u32 %v128, 7
  %v130 = vsub.s32 %v102, %v129
  %v131 = vrot.slane %v51, %v130
  %v132 = vlaneseq
  %v133 = vshrl.u32 %v132, 7
  %v134 = vsub.s32 %v107, %v133
  %v135 = vrot.slane %v54, %v134
  %v136 = vsel %vm112, %v135, %v131
  %v137 = vlaneseq
  %v138 = vshrl.u32 %v137, 7
  %v139 = vsub.s32 %v114, %v138
  %v140 = vrot.slane %v57, %v139
  %v141 = vsel %vm119, %v140, %v136
  %v142 = vlaneseq
  %v143 = vshrl.u32 %v142, 7
  %v144 = vsub.s32 %v121, %v143
  %v145 = vrot.slane %v60, %v144
  %v146 = vsel %vm126, %v145, %v141
  %vm147 = vcmask 1041409
  %v148 = vsel %vm147, %v146, %v127
  %v158 = vlaneseq
  %v159 = vshrl.u32 %v158, 7
  %v160 = vsub.s32 %v102, %v159
  %v161 = vrot.slane %v85, %v160
  %v162 = vlaneseq
  %v163 = vshrl.u32 %v162, 7
  %v164 = vsub.s32 %v107, %v163
  %v165 = vrot.slane %v86, %v164
  %v166 = vsel %vm112, %v165, %v161
  %v167 = vlaneseq
  %v168 = vshrl.u32 %v167, 7
  %v169 = vsub.s32 %v114, %v168
  %v170 = vrot.slane %v87, %v169
  %v171 = vsel %vm119, %v170, %v166
  %v172 = vlaneseq
  %v173 = vshrl.u32 %v172, 7
  %v174 = vsub.s32 %v121, %v173
  %v175 = vrot.slane %v88, %v174
  %v176 = vsel %vm126, %v175, %v171
  %v177 = vlaneseq
  %v178 = vshrl.u32 %v177, 7
  %v179 = vsub.s32 %v102, %v178
  %v180 = vrot.slane %v89, %v179
  %v181 = vlaneseq
  %v182 = vshrl.u32 %v181, 7
  %v183 = vsub.s32 %v107, %v182
  %v184 = vrot.slane %v90, %v183
  %v185 = vsel %vm112, %v184, %v180
  %v186 = vlaneseq
  %v187 = vshrl.u32 %v186, 7
  %v188 = vsub.s32 %v114, %v187
  %v189 = vrot.slane %v91, %v188
  %v190 = vsel %vm119, %v189, %v185
  %v191 = vlaneseq
  %v192 = vshrl.u32 %v191, 7
  %v193 = vsub.s32 %v121, %v192
  %v194 = vrot.slane %v92, %v193
  %v195 = vsel %vm126, %v194, %v190
  %vm196 = vcmask 1043459
  %v197 = vsel %vm196, %v195, %v176
  %vm199 = vcmask 1041408
  %v200 = vsel %vm199, %v148, %v197
  %v201 = vld [vmem:[%s1] sm:$0xff]
  %v202 = vld [vmem:[%s1 + $0x8] sm:$0xff]
  %v203 = vld [vmem:[%s1 + $0x10] sm:$0xff]
  %v204 = vld [vmem:[%s1 + $0x18] sm:$0xff]
  %vm205 = vcmask 261120
  %v207 = vsel %vm205, %v200, 0
  %209 = vmatprep.subr.mxu0 0.0
  %210 = vmatpush1.msra.mxu0 %v201
  %211 = vmatprep.subr.mxu0 0.0
  %212 = vmatpush1.msra.mxu0 %v202
  %213 = vmatprep.subr.mxu0 0.0
  %214 = vmatpush1.msra.mxu0 %v203
  %215 = vmatprep.subr.mxu0 0.0
  %216 = vmatpush1.msra.mxu0 %v204
  %217 = vmatprep.subr.mxu0 0.0
  %218 = vmatpush1.msra.mxu0 0.0
  %219 = vmatprep.subr.mxu0 0.0
  %220 = vmatpush1.msra.mxu0 0.0
  %221 = vmatprep.subr.mxu0 0.0
  %222 = vmatpush1.msra.mxu0 0.0
  %223 = vmatprep.subr.mxu0 0.0
  %224 = vmatpush1.msra.mxu0 0.0
  %225 = vmatprep.subr.mxu0 0.0
  %226 = vmatpush1.msra.mxu0 0.0
  %227 = vmatprep.subr.mxu0 0.0
  %228 = vmatpush1.msra.mxu0 0.0
  %229 = vmatprep.subr.mxu0 0.0
  %230 = vmatpush1.msra.mxu0 0.0
  %231 = vmatprep.subr.mxu0 0.0
  %232 = vmatpush1.msra.mxu0 0.0
  %233 = vmatprep.subr.mxu0 0.0
  %234 = vmatpush1.msra.mxu0 0.0
  %235 = vmatprep.subr.mxu0 0.0
  %236 = vmatpush1.msra.mxu0 0.0
  %237 = vmatprep.subr.mxu0 0.0
  %238 = vmatpush1.msra.mxu0 0.0
  %239 = vmatprep.subr.mxu0 0.0
  %240 = vmatpush1.msra.mxu0 0.0
  %241 = vmatprep.subr.mxu0 0.0
  %242 = vmatpush1.msra.mxu0 0.0
  %243 = vmatprep.subr.mxu0 0.0
  %244 = vmatpush1.msra.mxu0 0.0
  %245 = vmatprep.subr.mxu0 0.0
  %246 = vmatpush1.msra.mxu0 0.0
  %247 = vmatprep.subr.mxu0 0.0
  %248 = vmatpush1.msra.mxu0 0.0
  %249 = vmatprep.subr.mxu0 0.0
  %250 = vmatpush1.msra.mxu0 0.0
  %251 = vmatprep.subr.mxu0 0.0
  %252 = vmatpush1.msra.mxu0 0.0
  %253 = vmatprep.subr.mxu0 0.0
  %254 = vmatpush1.msra.mxu0 0.0
  %255 = vmatprep.subr.mxu0 0.0
  %256 = vmatpush1.msra.mxu0 0.0
  %257 = vmatprep.subr.mxu0 0.0
  %258 = vmatpush1.msra.mxu0 0.0
  %259 = vmatprep.subr.mxu0 0.0
  %260 = vmatpush1.msra.mxu0 0.0
  %261 = vmatprep.subr.mxu0 0.0
  %262 = vmatpush1.msra.mxu0 0.0
  %263 = vmatprep.subr.mxu0 0.0
  %264 = vmatpush1.msra.mxu0 0.0
  %265 = vmatprep.subr.mxu0 0.0
  %266 = vmatpush1.msra.mxu0 0.0
  %267 = vmatprep.subr.mxu0 0.0
  %268 = vmatpush1.msra.mxu0 0.0
  %269 = vmatprep.subr.mxu0 0.0
  %270 = vmatpush1.msra.mxu0 0.0
  %271 = vmatprep.subr.mxu0 0.0
  %272 = vmatpush1.msra.mxu0 0.0
  %273 = vmatprep.mubr.f32.mxu0 0.0
  %274 = vmatmul.mubr.f32.gmra.mrb[0].mxu0 %v207
  %v275 = vpop.f32.mrb[0].mxu0
  %v276 = vadd.f32 0.0, %v275
  %v277 = vpop.f32.mrb[0].mxu0
  %278 = vdwg.mxu0
  %v279 = vmax.f32 %v276, 0.0
  %v280 = vld [vmem:[%s2] sm:$0xff]
  %vm281 = vcmask 64512
  %v283 = vsel %vm281, %v279, 0
  %285 = vmatprep.subr.mxu0 0.0
  %286 = vmatpush1.msra.mxu0 %v280
  %287 = vmatprep.subr.mxu0 0.0
  %288 = vmatpush1.msra.mxu0 0.0
  %289 = vmatprep.subr.mxu0 0.0
  %290 = vmatpush1.msra.mxu0 0.0
  %291 = vmatprep.subr.mxu0 0.0
  %292 = vmatpush1.msra.mxu0 0.0
  %293 = vmatprep.subr.mxu0 0.0
  %294 = vmatpush1.msra.mxu0 0.0
  %295 = vmatprep.subr.mxu0 0.0
  %296 = vmatpush1.msra.mxu0 0.0
  %297 = vmatprep.subr.mxu0 0.0
  %298 = vmatpush1.msra.mxu0 0.0
  %299 = vmatprep.subr.mxu0 0.0
  %300 = vmatpush1.msra.mxu0 0.0
  %301 = vmatprep.subr.mxu0 0.0
  %302 = vmatpush1.msra.mxu0 0.0
  %303 = vmatprep.subr.mxu0 0.0
  %304 = vmatpush1.msra.mxu0 0.0
  %305 = vmatprep.subr.mxu0 0.0
  %306 = vmatpush1.msra.mxu0 0.0
  %307 = vmatprep.subr.mxu0 0.0
  %308 = vmatpush1.msra.mxu0 0.0
  %309 = vmatprep.subr.mxu0 0.0
  %310 = vmatpush1.msra.mxu0 0.0
  %311 = vmatprep.subr.mxu0 0.0
  %312 = vmatpush1.msra.mxu0 0.0
  %313 = vmatprep.subr.mxu0 0.0
  %314 = vmatpush1.msra.mxu0 0.0
  %315 = vmatprep.subr.mxu0 0.0
  %316 = vmatpush1.msra.mxu0 0.0
  %317 = vmatprep.subr.mxu0 0.0
  %318 = vmatpush1.msra.mxu0 0.0
  %319 = vmatprep.subr.mxu0 0.0
  %320 = vmatpush1.msra.mxu0 0.0
  %321 = vmatprep.subr.mxu0 0.0
  %322 = vmatpush1.msra.mxu0 0.0
  %323 = vmatprep.subr.mxu0 0.0
  %324 = vmatpush1.msra.mxu0 0.0
  %325 = vmatprep.subr.mxu0 0.0
  %326 = vmatpush1.msra.mxu0 0.0
  %327 = vmatprep.subr.mxu0 0.0
  %328 = vmatpush1.msra.mxu0 0.0
  %329 = vmatprep.subr.mxu0 0.0
  %330 = vmatpush1.msra.mxu0 0.0
  %331 = vmatprep.subr.mxu0 0.0
  %332 = vmatpush1.msra.mxu0 0.0
  %333 = vmatprep.subr.mxu0 0.0
  %334 = vmatpush1.msra.mxu0 0.0
  %335 = vmatprep.subr.mxu0 0.0
  %336 = vmatpush1.msra.mxu0 0.0
  %337 = vmatprep.subr.mxu0 0.0
  %338 = vmatpush1.msra.mxu0 0.0
  %339 = vmatprep.subr.mxu0 0.0
  %340 = vmatpush1.msra.mxu0 0.0
  %341 = vmatprep.subr.mxu0 0.0
  %342 = vmatpush1.msra.mxu0 0.0
  %343 = vmatprep.subr.mxu0 0.0
  %344 = vmatpush1.msra.mxu0 0.0
  %345 = vmatprep.subr.mxu0 0.0
  %346 = vmatpush1.msra.mxu0 0.0
  %347 = vmatprep.subr.mxu0 0.0
  %348 = vmatpush1.msra.mxu0 0.0
  %349 = vmatprep.mubr.f32.mxu0 0.0
  %350 = vmatmul.mubr.f32.gmra.mrb[0].mxu0 %v283
  %v351 = vpop.f32.mrb[0].mxu0
  %v352 = vadd.f32 0.0, %v351
  %v353 = vpop.f32.mrb[0].mxu0
  %354 = vdwg.mxu0
  %v356 = vrot.slane %v352, 2
  %v358 = vadd.f32 %v352, %v356
  %v359 = vxor.u32 %v358, 2147483648
  %v360 = vmul.f32 %v359, 1.442695
  %v361 = vpow.pop %v360
  %v362 = vadd.f32 %v361, 1.0
  %v363 = vrcp.pop %v362
  %v364 = vmul.f32 1.0, %v363
  %v365 = vlaneseq
  %v366 = vshrl.u32 %v365, 7
  %v367 = vsub.s32 0, %v366
  %v368 = vrot.slane %v364, %v367
  %370 = vbcast.lane.b32.xlu0 %v368, 256
  %v371 = vpop.permute.xlu0 %370
  %s373 = sor.u32 256, 8
  %374 = vbcast.lane.b32.xlu0 %v368, %s373
  %v375 = vpop.permute.xlu0 %374
  %s377 = sor.u32 256, 16
  %378 = vbcast.lane.b32.xlu0 %v368, %s377
  %v379 = vpop.permute.xlu0 %378
  %s381 = sor.u32 256, 24
  %382 = vbcast.lane.b32.xlu0 %v368, %s381
  %v383 = vpop.permute.xlu0 %382
  %v384 = vlaneseq
  %v385 = vshrl.u32 %v384, 7
  %v386 = vsub.s32 1, %v385
  %v387 = vrot.slane %v364, %v386
  %389 = vbcast.lane.b32.xlu0 %v387, 256
  %v390 = vpop.permute.xlu0 %389
  %s392 = sor.u32 256, 8
  %393 = vbcast.lane.b32.xlu0 %v387, %s392
  %v394 = vpop.permute.xlu0 %393
  %s396 = sor.u32 256, 16
  %397 = vbcast.lane.b32.xlu0 %v387, %s396
  %v398 = vpop.permute.xlu0 %397
  %s400 = sor.u32 256, 24
  %401 = vbcast.lane.b32.xlu0 %v387, %s400
  %v402 = vpop.permute.xlu0 %401
  %v403 = vmul.f32 %v21, %v371
  %v404 = vmul.f32 %v22, %v371
  %v405 = vmul.f32 %v23, %v375
  %v406 = vmul.f32 %v24, %v375
  %v407 = vmul.f32 %v25, %v379
  %v408 = vmul.f32 %v26, %v379
  %v409 = vmul.f32 %v27, %v383
  %v410 = vmul.f32 %v28, %v383
  %v411 = vmul.f32 %v29, %v390
  %v412 = vmul.f32 %v30, %v390
  %v413 = vmul.f32 %v31, %v394
  %v414 = vmul.f32 %v32, %v394
  %v415 = vmul.f32 %v33, %v398
  %v416 = vmul.f32 %v34, %v398
  %v417 = vmul.f32 %v35, %v402
  %v418 = vmul.f32 %v36, %v402
  %v419 = vmax.f32 %v403, %v405
  %v420 = vmax.f32 %v419, %v407
  %v421 = vmax.f32 %v420, %v409
  %v422 = vrot.slane %v421, 4
  %v423 = vmax.f32 %v421, %v422
  %v424 = vrot.slane %v423, 2
  %v425 = vmax.f32 %v423, %v424
  %v426 = vrot.slane %v425, 1
  %v427 = vmax.f32 %v425, %v426
  %v428 = vmax.f32 %v404, %v406
  %v429 = vmax.f32 %v428, %v408
  %v430 = vmax.f32 %v429, %v410
  %v431 = vrot.slane %v430, 4
  %v432 = vmax.f32 %v430, %v431
  %v433 = vrot.slane %v432, 2
  %v434 = vmax.f32 %v432, %v433
  %v435 = vrot.slane %v434, 1
  %v436 = vmax.f32 %v434, %v435
  %v437 = vmax.f32 %v411, %v413
  %v438 = vmax.f32 %v437, %v415
  %v439 = vmax.f32 %v438, %v417
  %v440 = vrot.slane %v439, 4
  %v441 = vmax.f32 %v439, %v440
  %v442 = vrot.slane %v441, 2
  %v443 = vmax.f32 %v441, %v442
  %v444 = vrot.slane %v443, 1
  %v445 = vmax.f32 %v443, %v444
  %v446 = vmax.f32 %v412, %v414
  %v447 = vmax.f32 %v446, %v416
  %v448 = vmax.f32 %v447, %v418
  %v449 = vrot.slane %v448, 4
  %v450 = vmax.f32 %v448, %v449
  %v451 = vrot.slane %v450, 2
  %v452 = vmax.f32 %v450, %v451
  %v453 = vrot.slane %v452, 1
  %v454 = vmax.f32 %v452, %v453
  %v455 = vadd.f32 %v403, %v405
  %v456 = vadd.f32 %v455, %v407
  %v457 = vadd.f32 %v456, %v409
  %v458 = vrot.slane %v457, 4
  %v459 = vadd.f32 %v457, %v458
  %v460 = vrot.slane %v459, 2
  %v461 = vadd.f32 %v459, %v460
  %v462 = vrot.slane %v461, 1
  %v463 = vadd.f32 %v461, %v462
  %v464 = vadd.f32 %v404, %v406
  %v465 = vadd.f32 %v464, %v408
  %v466 = vadd.f32 %v465, %v410
  %v467 = vrot.slane %v466, 4
  %v468 = vadd.f32 %v466, %v467
  %v469 = vrot.slane %v468, 2
  %v470 = vadd.f32 %v468, %v469
  %v471 = vrot.slane %v470, 1
  %v472 = vadd.f32 %v470, %v471
  %v473 = vadd.f32 %v411, %v413
  %v474 = vadd.f32 %v473, %v415
  %v475 = vadd.f32 %v474, %v417
  %v476 = vrot.slane %v475, 4
  %v477 = vadd.f32 %v475, %v476
  %v478 = vrot.slane %v477, 2
  %v479 = vadd.f32 %v477, %v478
  %v480 = vrot.slane %v479, 1
  %v481 = vadd.f32 %v479, %v480
  %v482 = vadd.f32 %v412, %v414
  %v483 = vadd.f32 %v482, %v416
  %v484 = vadd.f32 %v483, %v418
  %v485 = vrot.slane %v484, 4
  %v486 = vadd.f32 %v484, %v485
  %v487 = vrot.slane %v486, 2
  %v488 = vadd.f32 %v486, %v487
  %v489 = vrot.slane %v488, 1
  %v490 = vadd.f32 %v488, %v489
  %v491 = vmul.f32 %v463, 0.03125
  %v492 = vmul.f32 %v472, 0.03125
  %v493 = vmul.f32 %v481, 0.03125
  %v494 = vmul.f32 %v490, 0.03125
  %v499 = vsel %vm147, %v445, %v427
  %v500 = vsel %vm147, %v454, %v436
  %v507 = vsel %vm196, %v493, %v491
  %v508 = vsel %vm196, %v494, %v492
  %v511 = vsel %vm199, %v499, %v507
  %v512 = vsel %vm199, %v500, %v508
  %514 = vrot.lane.b32.xlu0 %v512, 51
  %v515 = vpop.permute.xlu0 %514
  %518 = vrot.lane.b32.xlu0 %v511, 51
  %v519 = vpop.permute.xlu0 %518
  %vm520 = vcmask 416768
  %v521 = vsel %vm520, %v519, %v515
  %v524 = vsel %vm520, %v515, %v519
  %v525 = vld [vmem:[%s3] sm:$0xff]
  %v527 = vcombine.high %v525, %v525
  %v529 = vmul.f32 %v524, %v525
  %v530 = vmul.f32 %v521, %v527
  %531 = vrot.lane.b32.xlu0 %v512, 50
  %v532 = vpop.permute.xlu0 %531
  %534 = vrot.lane.b32.xlu0 %v511, 50
  %v535 = vpop.permute.xlu0 %534
  %vm536 = vcmask 408576
  %v537 = vsel %vm536, %v535, %v532
  %v540 = vsel %vm536, %v532, %v535
  %s541 = scalar_lea.vmem %s3, 8
  %v542 = vld [vmem:[%s541] sm:$0xff]
  %v544 = vcombine.high %v542, %v542
  %v546 = vmul.f32 %v540, %v542
  %v547 = vmul.f32 %v537, %v544
  %v548 = vadd.f32 %v529, %v546
  %v549 = vadd.f32 %v530, %v547
  %550 = vrot.lane.b32.xlu0 %v512, 49
  %v551 = vpop.permute.xlu0 %550
  %553 = vrot.lane.b32.xlu0 %v511, 49
  %v554 = vpop.permute.xlu0 %553
  %vm555 = vcmask 400384
  %v556 = vsel %vm555, %v554, %v551
  %v559 = vsel %vm555, %v551, %v554
  %s560 = scalar_lea.vmem %s3, 16
  %v561 = vld [vmem:[%s560] sm:$0xff]
  %v563 = vcombine.high %v561, %v561
  %v565 = vmul.f32 %v559, %v561
  %v566 = vmul.f32 %v556, %v563
  %v567 = vadd.f32 %v548, %v565
  %v568 = vadd.f32 %v549, %v566
  %569 = vrot.lane.b32.xlu0 %v512, 48
  %v570 = vpop.permute.xlu0 %569
  %572 = vrot.lane.b32.xlu0 %v511, 48
  %v573 = vpop.permute.xlu0 %572
  %vm574 = vcmask 392192
  %v575 = vsel %vm574, %v573, %v570
  %v578 = vsel %vm574, %v570, %v573
  %s579 = scalar_lea.vmem %s3, 24
  %v580 = vld [vmem:[%s579] sm:$0xff]
  %v582 = vcombine.high %v580, %v580
  %v584 = vmul.f32 %v578, %v580
  %v585 = vmul.f32 %v575, %v582
  %v586 = vadd.f32 %v567, %v584
  %v587 = vadd.f32 %v568, %v585
  %588 = vrot.lane.b32.xlu0 %v512, 47
  %v589 = vpop.permute.xlu0 %588
  %591 = vrot.lane.b32.xlu0 %v511, 47
  %v592 = vpop.permute.xlu0 %591
  %vm593 = vcmask 384000
  %v594 = vsel %vm593, %v592, %v589
  %v597 = vsel %vm593, %v589, %v592
  %s598 = scalar_lea.vmem %s3, 32
  %v599 = vld [vmem:[%s598] sm:$0xff]
  %v601 = vcombine.high %v599, %v599
  %v603 = vmul.f32 %v597, %v599
  %v604 = vmul.f32 %v594, %v601
  %v605 = vadd.f32 %v586, %v603
  %v606 = vadd.f32 %v587, %v604
  %607 = vrot.lane.b32.xlu0 %v512, 46
  %v608 = vpop.permute.xlu0 %607
  %610 = vrot.lane.b32.xlu0 %v511, 46
  %v611 = vpop.permute.xlu0 %610
  %vm612 = vcmask 375808
  %v613 = vsel %vm612, %v611, %v608
  %v616 = vsel %vm612, %v608, %v611
  %s617 = scalar_lea.vmem %s3, 40
  %v618 = vld [vmem:[%s617] sm:$0xff]
  %v620 = vcombine.high %v618, %v618
  %v622 = vmul.f32 %v616, %v618
  %v623 = vmul.f32 %v613, %v620
  %v624 = vadd.f32 %v605, %v622
  %v625 = vadd.f32 %v606, %v623
  %626 = vrot.lane.b32.xlu0 %v512, 45
  %v627 = vpop.permute.xlu0 %626
  %629 = vrot.lane.b32.xlu0 %v511, 45
  %v630 = vpop.permute.xlu0 %629
  %vm631 = vcmask 367616
  %v632 = vsel %vm631, %v630, %v627
  %v635 = vsel %vm631, %v627, %v630
  %s636 = scalar_lea.vmem %s3, 48
  %v637 = vld [vmem:[%s636] sm:$0xff]
  %v639 = vcombine.high %v637, %v637
  %v641 = vmul.f32 %v635, %v637
  %v642 = vmul.f32 %v632, %v639
  %v643 = vadd.f32 %v624, %v641
  %v644 = vadd.f32 %v625, %v642
  %645 = vrot.lane.b32.xlu0 %v512, 35
  %v646 = vpop.permute.xlu0 %645
  %648 = vrot.lane.b32.xlu0 %v511, 35
  %v649 = vpop.permute.xlu0 %648
  %vm650 = vcmask 285696
  %v651 = vsel %vm650, %v649, %v646
  %v654 = vsel %vm650, %v646, %v649
  %s655 = scalar_lea.vmem %s3, 56
  %v656 = vld [vmem:[%s655] sm:$0xff]
  %v658 = vcombine.high %v656, %v656
  %v660 = vmul.f32 %v654, %v656
  %v661 = vmul.f32 %v651, %v658
  %v662 = vadd.f32 %v643, %v660
  %v663 = vadd.f32 %v644, %v661
  %664 = vrot.lane.b32.xlu0 %v512, 34
  %v665 = vpop.permute.xlu0 %664
  %667 = vrot.lane.b32.xlu0 %v511, 34
  %v668 = vpop.permute.xlu0 %667
  %vm669 = vcmask 277504
  %v670 = vsel %vm669, %v668, %v665
  %v673 = vsel %vm669, %v665, %v668
  %s674 = scalar_lea.vmem %s3, 64
  %v675 = vld [vmem:[%s674] sm:$0xff]
  %v677 = vcombine.high %v675, %v675
  %v679 = vmul.f32 %v673, %v675
  %v680 = vmul.f32 %v670, %v677
  %v681 = vadd.f32 %v662, %v679
  %v682 = vadd.f32 %v663, %v680
  %683 = vrot.lane.b32.xlu0 %v512, 33
  %v684 = vpop.permute.xlu0 %683
  %686 = vrot.lane.b32.xlu0 %v511, 33
  %v687 = vpop.permute.xlu0 %686
  %vm688 = vcmask 269312
  %v689 = vsel %vm688, %v687, %v684
  %v692 = vsel %vm688, %v684, %v687
  %s693 = scalar_lea.vmem %s3, 72
  %v694 = vld [vmem:[%s693] sm:$0xff]
  %v696 = vcombine.high %v694, %v694
  %v698 = vmul.f32 %v692, %v694
  %v699 = vmul.f32 %v689, %v696
  %v700 = vadd.f32 %v681, %v698
  %v701 = vadd.f32 %v682, %v699
  %702 = vrot.lane.b32.xlu0 %v512, 32
  %v703 = vpop.permute.xlu0 %702
  %705 = vrot.lane.b32.xlu0 %v511, 32
  %v706 = vpop.permute.xlu0 %705
  %v707 = vsel %vm205, %v706, %v703
  %v710 = vsel %vm205, %v703, %v706
  %s711 = scalar_lea.vmem %s3, 80
  %v712 = vld [vmem:[%s711] sm:$0xff]
  %v714 = vcombine.high %v712, %v712
  %v716 = vmul.f32 %v710, %v712
  %v717 = vmul.f32 %v707, %v714
  %v718 = vadd.f32 %v700, %v716
  %v719 = vadd.f32 %v701, %v717
  %720 = vrot.lane.b32.xlu0 %v512, 31
  %v721 = vpop.permute.xlu0 %720
  %723 = vrot.lane.b32.xlu0 %v511, 31
  %v724 = vpop.permute.xlu0 %723
  %vm725 = vcmask 252928
  %v726 = vsel %vm725, %v724, %v721
  %v729 = vsel %vm725, %v721, %v724
  %s730 = scalar_lea.vmem %s3, 88
  %v731 = vld [vmem:[%s730] sm:$0xff]
  %v733 = vcombine.high %v731, %v731
  %v735 = vmul.f32 %v729, %v731
  %v736 = vmul.f32 %v726, %v733
  %v737 = vadd.f32 %v718, %v735
  %v738 = vadd.f32 %v719, %v736
  %739 = vrot.lane.b32.xlu0 %v512, 30
  %v740 = vpop.permute.xlu0 %739
  %742 = vrot.lane.b32.xlu0 %v511, 30
  %v743 = vpop.permute.xlu0 %742
  %vm744 = vcmask 244736
  %v745 = vsel %vm744, %v743, %v740
  %v748 = vsel %vm744, %v740, %v743
  %s749 = scalar_lea.vmem %s3, 96
  %v750 = vld [vmem:[%s749] sm:$0xff]
  %v752 = vcombine.high %v750, %v750
  %v754 = vmul.f32 %v748, %v750
  %v755 = vmul.f32 %v745, %v752
  %v756 = vadd.f32 %v737, %v754
  %v757 = vadd.f32 %v738, %v755
  %758 = vrot.lane.b32.xlu0 %v512, 29
  %v759 = vpop.permute.xlu0 %758
  %761 = vrot.lane.b32.xlu0 %v511, 29
  %v762 = vpop.permute.xlu0 %761
  %vm763 = vcmask 236544
  %v764 = vsel %vm763, %v762, %v759
  %v767 = vsel %vm763, %v759, %v762
  %s768 = scalar_lea.vmem %s3, 104
  %v769 = vld [vmem:[%s768] sm:$0xff]
  %v771 = vcombine.high %v769, %v769
  %v773 = vmul.f32 %v767, %v769
  %v774 = vmul.f32 %v764, %v771
  %v775 = vadd.f32 %v756, %v773
  %v776 = vadd.f32 %v757, %v774
  %777 = vrot.lane.b32.xlu0 %v512, 19
  %v778 = vpop.permute.xlu0 %777
  %780 = vrot.lane.b32.xlu0 %v511, 19
  %v781 = vpop.permute.xlu0 %780
  %vm782 = vcmask 154624
  %v783 = vsel %vm782, %v781, %v778
  %v786 = vsel %vm782, %v778, %v781
  %s787 = scalar_lea.vmem %s3, 112
  %v788 = vld [vmem:[%s787] sm:$0xff]
  %v790 = vcombine.high %v788, %v788
  %v792 = vmul.f32 %v786, %v788
  %v793 = vmul.f32 %v783, %v790
  %v794 = vadd.f32 %v775, %v792
  %v795 = vadd.f32 %v776, %v793
  %796 = vrot.lane.b32.xlu0 %v512, 18
  %v797 = vpop.permute.xlu0 %796
  %799 = vrot.lane.b32.xlu0 %v511, 18
  %v800 = vpop.permute.xlu0 %799
  %vm801 = vcmask 146432
  %v802 = vsel %vm801, %v800, %v797
  %v805 = vsel %vm801, %v797, %v800
  %s806 = scalar_lea.vmem %s3, 120
  %v807 = vld [vmem:[%s806] sm:$0xff]
  %v809 = vcombine.high %v807, %v807
  %v811 = vmul.f32 %v805, %v807
  %v812 = vmul.f32 %v802, %v809
  %v813 = vadd.f32 %v794, %v811
  %v814 = vadd.f32 %v795, %v812
  %815 = vrot.lane.b32.xlu0 %v512, 17
  %v816 = vpop.permute.xlu0 %815
  %818 = vrot.lane.b32.xlu0 %v511, 17
  %v819 = vpop.permute.xlu0 %818
  %vm820 = vcmask 138240
  %v821 = vsel %vm820, %v819, %v816
  %v824 = vsel %vm820, %v816, %v819
  %s825 = scalar_lea.vmem %s3, 128
  %v826 = vld [vmem:[%s825] sm:$0xff]
  %v828 = vcombine.high %v826, %v826
  %v830 = vmul.f32 %v824, %v826
  %v831 = vmul.f32 %v821, %v828
  %v832 = vadd.f32 %v813, %v830
  %v833 = vadd.f32 %v814, %v831
  %834 = vrot.lane.b32.xlu0 %v512, 16
  %v835 = vpop.permute.xlu0 %834
  %837 = vrot.lane.b32.xlu0 %v511, 16
  %v838 = vpop.permute.xlu0 %837
  %vm839 = vcmask 130048
  %v840 = vsel %vm839, %v838, %v835
  %v843 = vsel %vm839, %v835, %v838
  %s844 = scalar_lea.vmem %s3, 136
  %v845 = vld [vmem:[%s844] sm:$0xff]
  %v847 = vcombine.high %v845, %v845
  %v849 = vmul.f32 %v843, %v845
  %v850 = vmul.f32 %v840, %v847
  %v851 = vadd.f32 %v832, %v849
  %v852 = vadd.f32 %v833, %v850
  %853 = vrot.lane.b32.xlu0 %v512, 15
  %v854 = vpop.permute.xlu0 %853
  %856 = vrot.lane.b32.xlu0 %v511, 15
  %v857 = vpop.permute.xlu0 %856
  %vm858 = vcmask 121856
  %v859 = vsel %vm858, %v857, %v854
  %v862 = vsel %vm858, %v854, %v857
  %s863 = scalar_lea.vmem %s3, 144
  %v864 = vld [vmem:[%s863] sm:$0xff]
  %v866 = vcombine.high %v864, %v864
  %v868 = vmul.f32 %v862, %v864
  %v869 = vmul.f32 %v859, %v866
  %v870 = vadd.f32 %v851, %v868
  %v871 = vadd.f32 %v852, %v869
  %872 = vrot.lane.b32.xlu0 %v512, 14
  %v873 = vpop.permute.xlu0 %872
  %875 = vrot.lane.b32.xlu0 %v511, 14
  %v876 = vpop.permute.xlu0 %875
  %vm877 = vcmask 113664
  %v878 = vsel %vm877, %v876, %v873
  %v881 = vsel %vm877, %v873, %v876
  %s882 = scalar_lea.vmem %s3, 152
  %v883 = vld [vmem:[%s882] sm:$0xff]
  %v885 = vcombine.high %v883, %v883
  %v887 = vmul.f32 %v881, %v883
  %v888 = vmul.f32 %v878, %v885
  %v889 = vadd.f32 %v870, %v887
  %v890 = vadd.f32 %v871, %v888
  %891 = vrot.lane.b32.xlu0 %v512, 13
  %v892 = vpop.permute.xlu0 %891
  %894 = vrot.lane.b32.xlu0 %v511, 13
  %v895 = vpop.permute.xlu0 %894
  %vm896 = vcmask 105472
  %v897 = vsel %vm896, %v895, %v892
  %v900 = vsel %vm896, %v892, %v895
  %s901 = scalar_lea.vmem %s3, 160
  %v902 = vld [vmem:[%s901] sm:$0xff]
  %v904 = vcombine.high %v902, %v902
  %v906 = vmul.f32 %v900, %v902
  %v907 = vmul.f32 %v897, %v904
  %v908 = vadd.f32 %v889, %v906
  %v909 = vadd.f32 %v890, %v907
  %910 = vrot.lane.b32.xlu0 %v512, 3
  %v911 = vpop.permute.xlu0 %910
  %913 = vrot.lane.b32.xlu0 %v511, 3
  %v914 = vpop.permute.xlu0 %913
  %vm915 = vcmask 23552
  %v916 = vsel %vm915, %v914, %v911
  %v919 = vsel %vm915, %v911, %v914
  %s920 = scalar_lea.vmem %s3, 168
  %v921 = vld [vmem:[%s920] sm:$0xff]
  %v923 = vcombine.high %v921, %v921
  %v925 = vmul.f32 %v919, %v921
  %v926 = vmul.f32 %v916, %v923
  %v927 = vadd.f32 %v908, %v925
  %v928 = vadd.f32 %v909, %v926
  %929 = vrot.lane.b32.xlu0 %v512, 2
  %v930 = vpop.permute.xlu0 %929
  %932 = vrot.lane.b32.xlu0 %v511, 2
  %v933 = vpop.permute.xlu0 %932
  %vm934 = vcmask 15360
  %v935 = vsel %vm934, %v933, %v930
  %v938 = vsel %vm934, %v930, %v933
  %s939 = scalar_lea.vmem %s3, 176
  %v940 = vld [vmem:[%s939] sm:$0xff]
  %v942 = vcombine.high %v940, %v940
  %v944 = vmul.f32 %v938, %v940
  %v945 = vmul.f32 %v935, %v942
  %v946 = vadd.f32 %v927, %v944
  %v947 = vadd.f32 %v928, %v945
  %948 = vrot.lane.b32.xlu0 %v512, 1
  %v949 = vpop.permute.xlu0 %948
  %951 = vrot.lane.b32.xlu0 %v511, 1
  %v952 = vpop.permute.xlu0 %951
  %vm953 = vcmask 7168
  %v954 = vsel %vm953, %v952, %v949
  %v957 = vsel %vm953, %v949, %v952
  %s958 = scalar_lea.vmem %s3, 184
  %v959 = vld [vmem:[%s958] sm:$0xff]
  %v961 = vcombine.high %v959, %v959
  %v963 = vmul.f32 %v957, %v959
  %v964 = vmul.f32 %v954, %v961
  %v965 = vadd.f32 %v946, %v963
  %v966 = vadd.f32 %v947, %v964
  %s967 = scalar_lea.vmem %s3, 192
  %v968 = vld [vmem:[%s967] sm:$0xff]
  %v970 = vcombine.high %v968, %v968
  %v972 = vmul.f32 %v511, %v968
  %v973 = vmul.f32 %v512, %v970
  %v974 = vadd.f32 %v965, %v972
  %v975 = vadd.f32 %v966, %v973
  %976 = vrot.lane.b32.xlu0 %v511, 127
  %v977 = vpop.permute.xlu0 %976
  %978 = vrot.lane.b32.xlu0 %v512, 127
  %v979 = vpop.permute.xlu0 %978
  %vm980 = vcmask 1039360
  %v981 = vsel %vm980, %v977, %v979
  %v985 = vsel %vm980, %v979, %v977
  %s986 = scalar_lea.vmem %s3, 200
  %v987 = vld [vmem:[%s986] sm:$0xff]
  %v989 = vcombine.high %v987, %v987
  %v991 = vmul.f32 %v981, %v987
  %v992 = vmul.f32 %v985, %v989
  %v993 = vadd.f32 %v974, %v991
  %v994 = vadd.f32 %v975, %v992
  %995 = vrot.lane.b32.xlu0 %v511, 126
  %v996 = vpop.permute.xlu0 %995
  %997 = vrot.lane.b32.xlu0 %v512, 126
  %v998 = vpop.permute.xlu0 %997
  %vm999 = vcmask 1031168
  %v1000 = vsel %vm999, %v996, %v998
  %v1004 = vsel %vm999, %v998, %v996
  %s1005 = scalar_lea.vmem %s3, 208
  %v1006 = vld [vmem:[%s1005] sm:$0xff]
  %v1008 = vcombine.high %v1006, %v1006
  %v1010 = vmul.f32 %v1000, %v1006
  %v1011 = vmul.f32 %v1004, %v1008
  %v1012 = vadd.f32 %v993, %v1010
  %v1013 = vadd.f32 %v994, %v1011
  %1014 = vrot.lane.b32.xlu0 %v511, 125
  %v1015 = vpop.permute.xlu0 %1014
  %1016 = vrot.lane.b32.xlu0 %v512, 125
  %v1017 = vpop.permute.xlu0 %1016
  %vm1018 = vcmask 1022976
  %v1019 = vsel %vm1018, %v1015, %v1017
  %v1023 = vsel %vm1018, %v1017, %v1015
  %s1024 = scalar_lea.vmem %s3, 216
  %v1025 = vld [vmem:[%s1024] sm:$0xff]
  %v1027 = vcombine.high %v1025, %v1025
  %v1029 = vmul.f32 %v1019, %v1025
  %v1030 = vmul.f32 %v1023, %v1027
  %v1031 = vadd.f32 %v1012, %v1029
  %v1032 = vadd.f32 %v1013, %v1030
  %1033 = vrot.lane.b32.xlu0 %v511, 115
  %v1034 = vpop.permute.xlu0 %1033
  %1035 = vrot.lane.b32.xlu0 %v512, 115
  %v1036 = vpop.permute.xlu0 %1035
  %vm1037 = vcmask 941056
  %v1038 = vsel %vm1037, %v1034, %v1036
  %v1042 = vsel %vm1037, %v1036, %v1034
  %s1043 = scalar_lea.vmem %s3, 224
  %v1044 = vld [vmem:[%s1043] sm:$0xff]
  %v1046 = vcombine.high %v1044, %v1044
  %v1048 = vmul.f32 %v1038, %v1044
  %v1049 = vmul.f32 %v1042, %v1046
  %v1050 = vadd.f32 %v1031, %v1048
  %v1051 = vadd.f32 %v1032, %v1049
  %1052 = vrot.lane.b32.xlu0 %v511, 114
  %v1053 = vpop.permute.xlu0 %1052
  %1054 = vrot.lane.b32.xlu0 %v512, 114
  %v1055 = vpop.permute.xlu0 %1054
  %vm1056 = vcmask 932864
  %v1057 = vsel %vm1056, %v1053, %v1055
  %v1061 = vsel %vm1056, %v1055, %v1053
  %s1062 = scalar_lea.vmem %s3, 232
  %v1063 = vld [vmem:[%s1062] sm:$0xff]
  %v1065 = vcombine.high %v1063, %v1063
  %v1067 = vmul.f32 %v1057, %v1063
  %v1068 = vmul.f32 %v1061, %v1065
  %v1069 = vadd.f32 %v1050, %v1067
  %v1070 = vadd.f32 %v1051, %v1068
  %1071 = vrot.lane.b32.xlu0 %v511, 113
  %v1072 = vpop.permute.xlu0 %1071
  %1073 = vrot.lane.b32.xlu0 %v512, 113
  %v1074 = vpop.permute.xlu0 %1073
  %vm1075 = vcmask 924672
  %v1076 = vsel %vm1075, %v1072, %v1074
  %v1080 = vsel %vm1075, %v1074, %v1072
  %s1081 = scalar_lea.vmem %s3, 240
  %v1082 = vld [vmem:[%s1081] sm:$0xff]
  %v1084 = vcombine.high %v1082, %v1082
  %v1086 = vmul.f32 %v1076, %v1082
  %v1087 = vmul.f32 %v1080, %v1084
  %v1088 = vadd.f32 %v1069, %v1086
  %v1089 = vadd.f32 %v1070, %v1087
  %1090 = vrot.lane.b32.xlu0 %v511, 112
  %v1091 = vpop.permute.xlu0 %1090
  %1092 = vrot.lane.b32.xlu0 %v512, 112
  %v1093 = vpop.permute.xlu0 %1092
  %vm1094 = vcmask 916480
  %v1095 = vsel %vm1094, %v1091, %v1093
  %v1099 = vsel %vm1094, %v1093, %v1091
  %s1100 = scalar_lea.vmem %s3, 248
  %v1101 = vld [vmem:[%s1100] sm:$0xff]
  %v1103 = vcombine.high %v1101, %v1101
  %v1105 = vmul.f32 %v1095, %v1101
  %v1106 = vmul.f32 %v1099, %v1103
  %v1107 = vadd.f32 %v1088, %v1105
  %v1108 = vadd.f32 %v1089, %v1106
  %1109 = vrot.lane.b32.xlu0 %v511, 111
  %v1110 = vpop.permute.xlu0 %1109
  %1111 = vrot.lane.b32.xlu0 %v512, 111
  %v1112 = vpop.permute.xlu0 %1111
  %vm1113 = vcmask 908288
  %v1114 = vsel %vm1113, %v1110, %v1112
  %v1118 = vsel %vm1113, %v1112, %v1110
  %s1119 = scalar_lea.vmem %s3, 256
  %v1120 = vld [vmem:[%s1119] sm:$0xff]
  %v1122 = vcombine.high %v1120, %v1120
  %v1124 = vmul.f32 %v1114, %v1120
  %v1125 = vmul.f32 %v1118, %v1122
  %v1126 = vadd.f32 %v1107, %v1124
  %v1127 = vadd.f32 %v1108, %v1125
  %1128 = vrot.lane.b32.xlu0 %v511, 110
  %v1129 = vpop.permute.xlu0 %1128
  %1130 = vrot.lane.b32.xlu0 %v512, 110
  %v1131 = vpop.permute.xlu0 %1130
  %vm1132 = vcmask 900096
  %v1133 = vsel %vm1132, %v1129, %v1131
  %v1137 = vsel %vm1132, %v1131, %v1129
  %s1138 = scalar_lea.vmem %s3, 264
  %v1139 = vld [vmem:[%s1138] sm:$0xff]
  %v1141 = vcombine.high %v1139, %v1139
  %v1143 = vmul.f32 %v1133, %v1139
  %v1144 = vmul.f32 %v1137, %v1141
  %v1145 = vadd.f32 %v1126, %v1143
  %v1146 = vadd.f32 %v1127, %v1144
  %1147 = vrot.lane.b32.xlu0 %v511, 109
  %v1148 = vpop.permute.xlu0 %1147
  %1149 = vrot.lane.b32.xlu0 %v512, 109
  %v1150 = vpop.permute.xlu0 %1149
  %vm1151 = vcmask 891904
  %v1152 = vsel %vm1151, %v1148, %v1150
  %v1156 = vsel %vm1151, %v1150, %v1148
  %s1157 = scalar_lea.vmem %s3, 272
  %v1158 = vld [vmem:[%s1157] sm:$0xff]
  %v1160 = vcombine.high %v1158, %v1158
  %v1162 = vmul.f32 %v1152, %v1158
  %v1163 = vmul.f32 %v1156, %v1160
  %v1164 = vadd.f32 %v1145, %v1162
  %v1165 = vadd.f32 %v1146, %v1163
  %1166 = vrot.lane.b32.xlu0 %v511, 99
  %v1167 = vpop.permute.xlu0 %1166
  %1168 = vrot.lane.b32.xlu0 %v512, 99
  %v1169 = vpop.permute.xlu0 %1168
  %vm1170 = vcmask 809984
  %v1171 = vsel %vm1170, %v1167, %v1169
  %v1175 = vsel %vm1170, %v1169, %v1167
  %s1176 = scalar_lea.vmem %s3, 280
  %v1177 = vld [vmem:[%s1176] sm:$0xff]
  %v1179 = vcombine.high %v1177, %v1177
  %v1181 = vmul.f32 %v1171, %v1177
  %v1182 = vmul.f32 %v1175, %v1179
  %v1183 = vadd.f32 %v1164, %v1181
  %v1184 = vadd.f32 %v1165, %v1182
  %1185 = vrot.lane.b32.xlu0 %v511, 98
  %v1186 = vpop.permute.xlu0 %1185
  %1187 = vrot.lane.b32.xlu0 %v512, 98
  %v1188 = vpop.permute.xlu0 %1187
  %vm1189 = vcmask 801792
  %v1190 = vsel %vm1189, %v1186, %v1188
  %v1194 = vsel %vm1189, %v1188, %v1186
  %s1195 = scalar_lea.vmem %s3, 288
  %v1196 = vld [vmem:[%s1195] sm:$0xff]
  %v1198 = vcombine.high %v1196, %v1196
  %v1200 = vmul.f32 %v1190, %v1196
  %v1201 = vmul.f32 %v1194, %v1198
  %v1202 = vadd.f32 %v1183, %v1200
  %v1203 = vadd.f32 %v1184, %v1201
  %1204 = vrot.lane.b32.xlu0 %v511, 97
  %v1205 = vpop.permute.xlu0 %1204
  %1206 = vrot.lane.b32.xlu0 %v512, 97
  %v1207 = vpop.permute.xlu0 %1206
  %vm1208 = vcmask 793600
  %v1209 = vsel %vm1208, %v1205, %v1207
  %v1213 = vsel %vm1208, %v1207, %v1205
  %s1214 = scalar_lea.vmem %s3, 296
  %v1215 = vld [vmem:[%s1214] sm:$0xff]
  %v1217 = vcombine.high %v1215, %v1215
  %v1219 = vmul.f32 %v1209, %v1215
  %v1220 = vmul.f32 %v1213, %v1217
  %v1221 = vadd.f32 %v1202, %v1219
  %v1222 = vadd.f32 %v1203, %v1220
  %1223 = vrot.lane.b32.xlu0 %v511, 96
  %v1224 = vpop.permute.xlu0 %1223
  %1225 = vrot.lane.b32.xlu0 %v512, 96
  %v1226 = vpop.permute.xlu0 %1225
  %vm1227 = vcmask 785408
  %v1228 = vsel %vm1227, %v1224, %v1226
  %v1232 = vsel %vm1227, %v1226, %v1224
  %s1233 = scalar_lea.vmem %s3, 304
  %v1234 = vld [vmem:[%s1233] sm:$0xff]
  %v1236 = vcombine.high %v1234, %v1234
  %v1238 = vmul.f32 %v1228, %v1234
  %v1239 = vmul.f32 %v1232, %v1236
  %v1240 = vadd.f32 %v1221, %v1238
  %v1241 = vadd.f32 %v1222, %v1239
  %1242 = vrot.lane.b32.xlu0 %v511, 95
  %v1243 = vpop.permute.xlu0 %1242
  %1244 = vrot.lane.b32.xlu0 %v512, 95
  %v1245 = vpop.permute.xlu0 %1244
  %vm1246 = vcmask 777216
  %v1247 = vsel %vm1246, %v1243, %v1245
  %v1251 = vsel %vm1246, %v1245, %v1243
  %s1252 = scalar_lea.vmem %s3, 312
  %v1253 = vld [vmem:[%s1252] sm:$0xff]
  %v1255 = vcombine.high %v1253, %v1253
  %v1257 = vmul.f32 %v1247, %v1253
  %v1258 = vmul.f32 %v1251, %v1255
  %v1259 = vadd.f32 %v1240, %v1257
  %v1260 = vadd.f32 %v1241, %v1258
  %1261 = vrot.lane.b32.xlu0 %v511, 94
  %v1262 = vpop.permute.xlu0 %1261
  %1263 = vrot.lane.b32.xlu0 %v512, 94
  %v1264 = vpop.permute.xlu0 %1263
  %vm1265 = vcmask 769024
  %v1266 = vsel %vm1265, %v1262, %v1264
  %v1270 = vsel %vm1265, %v1264, %v1262
  %s1271 = scalar_lea.vmem %s3, 320
  %v1272 = vld [vmem:[%s1271] sm:$0xff]
  %v1274 = vcombine.high %v1272, %v1272
  %v1276 = vmul.f32 %v1266, %v1272
  %v1277 = vmul.f32 %v1270, %v1274
  %v1278 = vadd.f32 %v1259, %v1276
  %v1279 = vadd.f32 %v1260, %v1277
  %1280 = vrot.lane.b32.xlu0 %v511, 93
  %v1281 = vpop.permute.xlu0 %1280
  %1282 = vrot.lane.b32.xlu0 %v512, 93
  %v1283 = vpop.permute.xlu0 %1282
  %vm1284 = vcmask 760832
  %v1285 = vsel %vm1284, %v1281, %v1283
  %v1289 = vsel %vm1284, %v1283, %v1281
  %s1290 = scalar_lea.vmem %s3, 328
  %v1291 = vld [vmem:[%s1290] sm:$0xff]
  %v1293 = vcombine.high %v1291, %v1291
  %v1295 = vmul.f32 %v1285, %v1291
  %v1296 = vmul.f32 %v1289, %v1293
  %v1297 = vadd.f32 %v1278, %v1295
  %v1298 = vadd.f32 %v1279, %v1296
  %1299 = vrot.lane.b32.xlu0 %v511, 83
  %v1300 = vpop.permute.xlu0 %1299
  %1301 = vrot.lane.b32.xlu0 %v512, 83
  %v1302 = vpop.permute.xlu0 %1301
  %vm1303 = vcmask 678912
  %v1304 = vsel %vm1303, %v1300, %v1302
  %v1308 = vsel %vm1303, %v1302, %v1300
  %s1309 = scalar_lea.vmem %s3, 336
  %v1310 = vld [vmem:[%s1309] sm:$0xff]
  %v1312 = vcombine.high %v1310, %v1310
  %v1314 = vmul.f32 %v1304, %v1310
  %v1315 = vmul.f32 %v1308, %v1312
  %v1316 = vadd.f32 %v1297, %v1314
  %v1317 = vadd.f32 %v1298, %v1315
  %1318 = vrot.lane.b32.xlu0 %v511, 82
  %v1319 = vpop.permute.xlu0 %1318
  %1320 = vrot.lane.b32.xlu0 %v512, 82
  %v1321 = vpop.permute.xlu0 %1320
  %vm1322 = vcmask 670720
  %v1323 = vsel %vm1322, %v1319, %v1321
  %v1327 = vsel %vm1322, %v1321, %v1319
  %s1328 = scalar_lea.vmem %s3, 344
  %v1329 = vld [vmem:[%s1328] sm:$0xff]
  %v1331 = vcombine.high %v1329, %v1329
  %v1333 = vmul.f32 %v1323, %v1329
  %v1334 = vmul.f32 %v1327, %v1331
  %v1335 = vadd.f32 %v1316, %v1333
  %v1336 = vadd.f32 %v1317, %v1334
  %1337 = vrot.lane.b32.xlu0 %v511, 81
  %v1338 = vpop.permute.xlu0 %1337
  %1339 = vrot.lane.b32.xlu0 %v512, 81
  %v1340 = vpop.permute.xlu0 %1339
  %vm1341 = vcmask 662528
  %v1342 = vsel %vm1341, %v1338, %v1340
  %v1346 = vsel %vm1341, %v1340, %v1338
  %s1347 = scalar_lea.vmem %s3, 352
  %v1348 = vld [vmem:[%s1347] sm:$0xff]
  %v1350 = vcombine.high %v1348, %v1348
  %v1352 = vmul.f32 %v1342, %v1348
  %v1353 = vmul.f32 %v1346, %v1350
  %v1354 = vadd.f32 %v1335, %v1352
  %v1355 = vadd.f32 %v1336, %v1353
  %1356 = vrot.lane.b32.xlu0 %v511, 80
  %v1357 = vpop.permute.xlu0 %1356
  %1358 = vrot.lane.b32.xlu0 %v512, 80
  %v1359 = vpop.permute.xlu0 %1358
  %vm1360 = vcmask 654336
  %v1361 = vsel %vm1360, %v1357, %v1359
  %v1365 = vsel %vm1360, %v1359, %v1357
  %s1366 = scalar_lea.vmem %s3, 360
  %v1367 = vld [vmem:[%s1366] sm:$0xff]
  %v1369 = vcombine.high %v1367, %v1367
  %v1371 = vmul.f32 %v1361, %v1367
  %v1372 = vmul.f32 %v1365, %v1369
  %v1373 = vadd.f32 %v1354, %v1371
  %v1374 = vadd.f32 %v1355, %v1372
  %1375 = vrot.lane.b32.xlu0 %v511, 79
  %v1376 = vpop.permute.xlu0 %1375
  %1377 = vrot.lane.b32.xlu0 %v512, 79
  %v1378 = vpop.permute.xlu0 %1377
  %vm1379 = vcmask 646144
  %v1380 = vsel %vm1379, %v1376, %v1378
  %v1384 = vsel %vm1379, %v1378, %v1376
  %s1385 = scalar_lea.vmem %s3, 368
  %v1386 = vld [vmem:[%s1385] sm:$0xff]
  %v1388 = vcombine.high %v1386, %v1386
  %v1390 = vmul.f32 %v1380, %v1386
  %v1391 = vmul.f32 %v1384, %v1388
  %v1392 = vadd.f32 %v1373, %v1390
  %v1393 = vadd.f32 %v1374, %v1391
  %1394 = vrot.lane.b32.xlu0 %v511, 78
  %v1395 = vpop.permute.xlu0 %1394
  %1396 = vrot.lane.b32.xlu0 %v512, 78
  %v1397 = vpop.permute.xlu0 %1396
  %vm1398 = vcmask 637952
  %v1399 = vsel %vm1398, %v1395, %v1397
  %v1403 = vsel %vm1398, %v1397, %v1395
  %s1404 = scalar_lea.vmem %s3, 376
  %v1405 = vld [vmem:[%s1404] sm:$0xff]
  %v1407 = vcombine.high %v1405, %v1405
  %v1409 = vmul.f32 %v1399, %v1405
  %v1410 = vmul.f32 %v1403, %v1407
  %v1411 = vadd.f32 %v1392, %v1409
  %v1412 = vadd.f32 %v1393, %v1410
  %1413 = vrot.lane.b32.xlu0 %v511, 77
  %v1414 = vpop.permute.xlu0 %1413
  %1415 = vrot.lane.b32.xlu0 %v512, 77
  %v1416 = vpop.permute.xlu0 %1415
  %vm1417 = vcmask 629760
  %v1418 = vsel %vm1417, %v1414, %v1416
  %v1422 = vsel %vm1417, %v1416, %v1414
  %s1423 = scalar_lea.vmem %s3, 384
  %v1424 = vld [vmem:[%s1423] sm:$0xff]
  %v1426 = vcombine.high %v1424, %v1424
  %v1428 = vmul.f32 %v1418, %v1424
  %v1429 = vmul.f32 %v1422, %v1426
  %v1430 = vadd.f32 %v1411, %v1428
  %v1431 = vadd.f32 %v1412, %v1429
  %v1434 = vrot.slane %v1430, 2
  %v1435 = vrot.slane %v1431, 2
  %v1438 = vadd.f32 %v1430, %v1434
  %v1439 = vadd.f32 %v1431, %v1435
  %s1440 = sld [smem:[#allocation2]]
  %v1441 = vstv %s1440
  %v1442 = vadd.f32 %v1438, %v1441
  %v1443 = vadd.f32 %v1439, %v1441
  %v1444 = vxor.u32 %v1442, 2147483648
  %v1445 = vxor.u32 %v1443, 2147483648
  %v1446 = vmul.f32 %v1444, 1.442695
  %v1447 = vpow.pop %v1446
  %v1448 = vmul.f32 %v1445, 1.442695
  %v1449 = vpow.pop %v1448
  %v1450 = vadd.f32 %v1447, 1.0
  %v1451 = vadd.f32 %v1449, 1.0
  %v1452 = vrcp.pop %v1450
  %v1453 = vmul.f32 1.0, %v1452
  %v1454 = vrcp.pop %v1451
  %v1455 = vmul.f32 1.0, %v1454
  %v1458 = vcombine.low %v1453, %v1455
  %v1460 = vunpack.c.l.s4 1966171168
  %v1461 = vunpack.c.0.s8 %v1460
  %v1462 = vlaneseq
  %v1463 = vshrl.u32 %v1462, 7
  %v1464 = vsub.s32 %v1461, %v1463
  %v1465 = vrot.slane %v1458, %v1464
  %v1466 = vcombine.high %v1465, %v1465
  %v1468 = vunpack.c.l.s4 1966171168
  %v1469 = vunpack.c.0.s8 %v1468
  %v1470 = vlaneseq
  %v1471 = vshrl.u32 %v1470, 7
  %v1472 = vsub.s32 %v1469, %v1471
  %v1473 = vrot.slane %v1465, %v1472
  %v1475 = vunpack.c.l.s4 1966171168
  %v1476 = vunpack.c.0.s8 %v1475
  %v1477 = vlaneseq
  %v1478 = vshrl.u32 %v1477, 7
  %v1479 = vsub.s32 %v1476, %v1478
  %v1480 = vrot.slane %v1466, %v1479
  %v1481 = vlaneseq
  %v1482 = vshrl.u32 %v1481, 7
  %v1483 = vsub.s32 0, %v1482
  %v1484 = vrot.slane %v1473, %v1483
  %v1485 = vlaneseq
  %v1486 = vshrl.u32 %v1485, 7
  %v1487 = vsub.s32 1, %v1486
  %v1488 = vrot.slane %v1473, %v1487
  %v1489 = vlaneseq
  %v1490 = vshrl.u32 %v1489, 7
  %v1491 = vsub.s32 0, %v1490
  %v1492 = vrot.slane %v1480, %v1491
  %v1493 = vlaneseq
  %v1494 = vshrl.u32 %v1493, 7
  %v1495 = vsub.s32 1, %v1494
  %v1496 = vrot.slane %v1480, %v1495
  %v1501 = vmul.f32 %v403, %v1484
  %v1502 = vmul.f32 %v404, %v1488
  %v1503 = vmul.f32 %v405, %v1484
  %v1504 = vmul.f32 %v406, %v1488
  %v1505 = vmul.f32 %v407, %v1484
  %v1506 = vmul.f32 %v408, %v1488
  %v1507 = vmul.f32 %v409, %v1484
  %v1508 = vmul.f32 %v410, %v1488
  %v1509 = vmul.f32 %v411, %v1492
  %v1510 = vmul.f32 %v412, %v1496
  %v1511 = vmul.f32 %v413, %v1492
  %v1512 = vmul.f32 %v414, %v1496
  %v1513 = vmul.f32 %v415, %v1492
  %v1514 = vmul.f32 %v416, %v1496
  %v1515 = vmul.f32 %v417, %v1492
  %v1516 = vmul.f32 %v418, %v1496
  %v1517 = vadd.f32 %v1501, %v21
  %v1518 = vadd.f32 %v1502, %v22
  %v1519 = vadd.f32 %v1503, %v23
  %v1520 = vadd.f32 %v1504, %v24
  %v1521 = vadd.f32 %v1505, %v25
  %v1522 = vadd.f32 %v1506, %v26
  %v1523 = vadd.f32 %v1507, %v27
  %v1524 = vadd.f32 %v1508, %v28
  %v1525 = vadd.f32 %v1509, %v29
  %v1526 = vadd.f32 %v1510, %v30
  %v1527 = vadd.f32 %v1511, %v31
  %v1528 = vadd.f32 %v1512, %v32
  %v1529 = vadd.f32 %v1513, %v33
  %v1530 = vadd.f32 %v1514, %v34
  %v1531 = vadd.f32 %v1515, %v35
  %v1532 = vadd.f32 %v1516, %v36
  %1533 = vst [vmem:[%s5] sm:$0xff] %v1517
  %1534 = vst [vmem:[%s5 + $0x8] sm:$0xff] %v1518
  %1535 = vst [vmem:[%s5 + $0x10] sm:$0xff] %v1519
  %1536 = vst [vmem:[%s5 + $0x18] sm:$0xff] %v1520
  %1537 = vst [vmem:[%s5 + $0x20] sm:$0xff] %v1521
  %1538 = vst [vmem:[%s5 + $0x28] sm:$0xff] %v1522
  %1539 = vst [vmem:[%s5 + $0x30] sm:$0xff] %v1523
  %1540 = vst [vmem:[%s5 + $0x38] sm:$0xff] %v1524
  %1541 = vst [vmem:[%s5 + $0x40] sm:$0xff] %v1525
  %1542 = vst [vmem:[%s5 + $0x48] sm:$0xff] %v1526
  %1543 = vst [vmem:[%s5 + $0x50] sm:$0xff] %v1527
  %1544 = vst [vmem:[%s5 + $0x58] sm:$0xff] %v1528
  %1545 = vst [vmem:[%s5 + $0x60] sm:$0xff] %v1529
  %1546 = vst [vmem:[%s5 + $0x68] sm:$0xff] %v1530
  %1547 = vst [vmem:[%s5 + $0x70] sm:$0xff] %v1531
  %1548 = vst [vmem:[%s5 + $0x78] sm:$0xff] %v1532
  // Predicated region
  $region22: #{run.1} parent=0 // pred_check
    _
  $region23: #{run.1} parent=0 // pred_check_branch
    %1550 = sbr.rel (0) target = $region25
  $region24: #{run.1} parent=0 // pred_region
    _
  $region25: #{run.1} parent=0 // pred_fallthru
    _
  // Predicated region
  $region26: #{run.1} parent=0 // pred_check
    _
  $region27: #{run.1} parent=0 // pred_check_branch
    %1552 = sbr.rel (0) target = $region29
  $region28: #{run.1} parent=0 // pred_region
    _
  $region29: #{run.1} parent=0 // pred_fallthru
    _

</llo_original>
